<compile_context>
chip_gen: v7x
topology: tpu7x:2x2x1
jax: 0.10.0
libtpu: 0.0.40
codegen_flags: <defaults>
</compile_context>

<pallas_src>
import functools

import jax
import jax.numpy as jnp
from jax.experimental import pallas as pl
from jax.experimental.pallas import tpu as pltpu

EPS = 1e-5
N_HIDDEN = 7    # fc1..fc7, each followed by BN(train)+ReLU; fc8 + softmax head
OUT = 2


def _round_up(n, m):
    return (n + m - 1) // m * m


def param_layout(input_size, hidden):
    """Row offsets of every parameter inside the single (rows, hidden) f32 slab."""
    off_w1 = 0                                        # (input_size, H) fc1 weight (in, out)
    off_wh = off_w1 + input_size                      # 6 stacked (H, H) fc2..fc7 weights
    off_bn = off_wh + (N_HIDDEN - 1) * hidden         # 14 rows: gamma_li at 2*li, beta_li at 2*li+1
    off_w8 = _round_up(off_bn + 2 * N_HIDDEN, 8)      # (OUT, H) = fc8 weight transposed
    off_b8 = off_w8 + OUT                             # 1 row, fc8 bias in lanes [0:OUT]
    rows = _round_up(off_b8 + 1, 8)
    return dict(w1=off_w1, wh=off_wh, bn=off_bn, w8=off_w8, b8=off_b8, rows=rows)


def _make_kernel(input_size, hidden, lay):
    H = hidden

    def kernel(x_ref, p_ref, out_ref):
        """x_ref: (B, input_size) f32; p_ref: (rows, H) f32 slab; out_ref: (B, OUT) f32."""
        inv_b = 1.0 / x_ref.shape[0]

        def bn_relu(z, li):
            # BatchNorm1d training mode: batch mean, biased batch variance, eps=1e-5.
            # Single cross-sublane reduce over the lane-concatenated [z | z*z] block.
            zz = jnp.concatenate([z, z * z], axis=1)                  # (B, 2H)
            s = jnp.sum(zz, axis=0, keepdims=True) * inv_b            # (1, 2H)
            mu = s[:, :H]                                             # (1, H)
            ms = s[:, H:]                                             # (1, H)
            var = jnp.maximum(ms - mu * mu, 0.0)                      # guard tiny negatives
            gb = p_ref[lay["bn"] + 2 * li:lay["bn"] + 2 * li + 2, :]  # (2, H) adjacent rows
            gamma = gb[0:1, :]
            beta = gb[1:2, :]
            scale = gamma * jax.lax.rsqrt(var + EPS)                  # EUP rsqrt, row-sized
            shift = beta - mu * scale
            return jnp.maximum(z * scale + shift, 0.0)                # one block FMA + ReLU

        # fc1 (+BN+ReLU). Linear bias dropped: cancels exactly through BN's batch-mean
        # subtraction in training mode.
        w1 = p_ref[lay["w1"]:lay["w1"] + input_size, :]
        h = bn_relu(jnp.dot(x_ref[...], w1, preferred_element_type=jnp.float32), 0)

        # fc2..fc7 (+BN+ReLU), statically unrolled over the stacked weight rows.
        for li in range(1, N_HIDDEN):
            off = lay["wh"] + (li - 1) * H
            w = p_ref[off:off + H, :]
            h = bn_relu(jnp.dot(h, w, preferred_element_type=jnp.float32), li)

        # fc8 + softmax(dim=1), exact division.
        w8t = p_ref[lay["w8"]:lay["w8"] + OUT, :]                     # (OUT, H)
        b8 = p_ref[lay["b8"]:lay["b8"] + 1, :][:, :OUT]               # (1, OUT)
        logits = jax.lax.dot_general(
            h, w8t, (((1,), (1,)), ((), ())),
            preferred_element_type=jnp.float32) + b8                  # (B, OUT)
        m = jnp.max(logits, axis=1, keepdims=True)
        e = jnp.exp(logits - m)
        out_ref[...] = e / jnp.sum(e, axis=1, keepdims=True)

    return kernel


@functools.partial(jax.jit, static_argnames=("input_size", "hidden"))
def mlp_mach5_forward_batched(xb, slab, *, input_size, hidden):
    """xb: (N, B, input_size) f32 — N independent problem instances (BN stats per instance).
    slab: (rows, hidden) f32 packed parameter slab.  Returns (N, B, OUT) softmax probs."""
    n_inst, batch, d = xb.shape
    rows, h = slab.shape
    lay = param_layout(input_size, hidden)
    assert d == input_size and h == hidden and rows == lay["rows"]

    kernel = _make_kernel(input_size, hidden, lay)

    flops_per_inst = 2 * batch * (input_size * hidden
                                  + (N_HIDDEN - 1) * hidden * hidden
                                  + hidden * OUT) + 10 * batch * hidden * N_HIDDEN
    transc_per_inst = N_HIDDEN * hidden + batch * OUT
    bytes_accessed = xb.size * 4 + slab.size * 4 + n_inst * batch * OUT * 4

    return pl.pallas_call(
        kernel,
        out_shape=jax.ShapeDtypeStruct((n_inst, batch, OUT), jnp.float32),
        grid=(n_inst,),
        in_specs=[
            # stream one instance per grid step (leading dim squeezed away in the kernel)
            pl.BlockSpec((None, batch, input_size), lambda i: (i, 0, 0)),
            # parameter slab: same block every step -> resident in VMEM across the grid
            pl.BlockSpec((rows, hidden), lambda i: (0, 0)),
        ],
        out_specs=pl.BlockSpec((None, batch, OUT), lambda i: (i, 0, 0)),
        compiler_params=pltpu.CompilerParams(dimension_semantics=("parallel",)),
        cost_estimate=pl.CostEstimate(
            flops=int(n_inst * flops_per_inst),
            transcendentals=int(n_inst * transc_per_inst),
            bytes_accessed=int(bytes_accessed)),
    )(xb, slab)


def mlp_mach5_forward(x, slab, *, input_size, hidden):
    """Original module semantics: x (B, input_size) -> (B, OUT)."""
    return mlp_mach5_forward_batched(x[None], slab,
                                     input_size=input_size, hidden=hidden)[0]


def init_raw_params(key, input_size, hidden, output_size=OUT):
    """PyTorch-like init: kaiming_uniform_ weights, default Linear bias.
    BN gamma/beta are randomized (PyTorch init is gamma=1/beta=0) so the fused BN-affine
    path is actually exercised by the correctness test — forward semantics are unchanged.
    Weights are stored pre-transposed as (in, out).  Hidden-layer biases exist so the
    pure-JAX reference matches the PyTorch module exactly, but they are NOT packed into
    the kernel slab (they cancel through training-mode BN)."""
    dims = [input_size] + [hidden] * N_HIDDEN + [output_size]
    raw = []
    for li in range(len(dims) - 1):
        fan_in, fan_out = dims[li], dims[li + 1]
        key, kw, kb, kg, kbe = jax.random.split(key, 5)
        w_bound = (6.0 / fan_in) ** 0.5
        w = jax.random.uniform(kw, (fan_in, fan_out), jnp.float32, -w_bound, w_bound)
        b_bound = 1.0 / (fan_in ** 0.5)
        b = jax.random.uniform(kb, (1, fan_out), jnp.float32, -b_bound, b_bound)
        layer = {"w": w, "b": b}
        if li < len(dims) - 2:
            layer["gamma"] = jax.random.uniform(kg, (1, fan_out), jnp.float32, 0.5, 1.5)
            layer["beta"] = jax.random.uniform(kbe, (1, fan_out), jnp.float32, -0.2, 0.2)
        raw.append(layer)
    return raw


def pack_params(raw, input_size, hidden):
    """Pack every parameter into one (rows, hidden) f32 slab (hidden widths must match)."""
    lay = param_layout(input_size, hidden)
    slab = jnp.zeros((lay["rows"], hidden), jnp.float32)
    slab = slab.at[lay["w1"]:lay["w1"] + input_size, :].set(raw[0]["w"])
    for li in range(1, N_HIDDEN):
        off = lay["wh"] + (li - 1) * hidden
        slab = slab.at[off:off + hidden, :].set(raw[li]["w"])
    for li in range(N_HIDDEN):
        slab = slab.at[lay["bn"] + 2 * li, :].set(raw[li]["gamma"][0])
        slab = slab.at[lay["bn"] + 2 * li + 1, :].set(raw[li]["beta"][0])
    slab = slab.at[lay["w8"]:lay["w8"] + OUT, :].set(raw[N_HIDDEN]["w"].T)
    slab = slab.at[lay["b8"], 0:OUT].set(raw[N_HIDDEN]["b"][0])
    return slab


def reference_forward(x, raw):
    """Pure-JAX reference for ONE instance, matching the PyTorch module (incl. hidden biases)."""
    h = x
    for li in range(N_HIDDEN):
        p = raw[li]
        z = h @ p["w"] + p["b"]
        mu = jnp.mean(z, axis=0, keepdims=True)
        var = jnp.mean((z - mu) ** 2, axis=0, keepdims=True)
        h = jnp.maximum((z - mu) / jnp.sqrt(var + EPS) * p["gamma"] + p["beta"], 0.0)
    logits = h @ raw[N_HIDDEN]["w"] + raw[N_HIDDEN]["b"]
    return jax.nn.softmax(logits, axis=1)


if __name__ == "__main__":
    key = jax.random.PRNGKey(0)

    n_instances = 4   # independent micro-batches amortizing launch + param DMAs over a grid
    batch = 8
    input_size = 16
    hidden = 32       # hidden1..hidden7 all 32 (equal widths required for weight stacking)

    key, kx, kp = jax.random.split(key, 3)
    xb = jax.random.normal(kx, (n_instances, batch, input_size), jnp.float32)
    raw = init_raw_params(kp, input_size, hidden)
    slab = pack_params(raw, input_size, hidden)

    # Batched-instance path (grid over instances, parameters resident in VMEM).
    out = jax.block_until_ready(
        mlp_mach5_forward_batched(xb, slab, input_size=input_size, hidden=hidden))
    ref = jnp.stack([reference_forward(xb[i], raw) for i in range(n_instances)])

    assert out.shape == (n_instances, batch, OUT)
    # Exact softmax division restored -> tight f32 tolerance (only f32 rounding and the
    # one-pass-variance formulation differ from the reference).
    assert jnp.allclose(out, ref, atol=5e-4, rtol=5e-4), "mismatch vs pure-JAX reference"
    assert jnp.allclose(jnp.sum(out, axis=-1), 1.0, atol=1e-4), "softmax rows must sum to 1"
    assert bool(jnp.all(jnp.isfinite(out)))

    # Single-call path (original module signature: (B, input_size) -> (B, 2)).
    out1 = jax.block_until_ready(
        mlp_mach5_forward(xb[0], slab, input_size=input_size, hidden=hidden))
    assert jnp.allclose(out1, ref[0], atol=5e-4, rtol=5e-4)

    # TODO(synk): dropout branches are inactive (dropout=None in the reference config), so
    # they are intentionally not implemented in the kernel.
    print("KERNEL_OK")
</pallas_src>

<mosaic_0001>
module attributes {stable_mosaic.version = 11 : i64} {
  func.func @kernel(%arg0: i32, %arg1: memref<1x8x16xf32, #tpu.memory_space<vmem>>, %arg2: memref<232x32xf32, #tpu.memory_space<vmem>>, %arg3: memref<1x8x2xf32, #tpu.memory_space<vmem>>) attributes {dimension_semantics = [#tpu.dimension_semantics<parallel>], iteration_bounds = array<i64: 4>, scalar_prefetch = 0 : i64, scratch_operands = 0 : i64, tpu.core_type = #tpu.core_type<tc>, window_params = [{transform_indices = @transform_0, window_bounds = array<i64: 1, 8, 16>}, {pipeline_mode = #tpu.pipeline_mode<synchronous>, transform_indices = @transform_1, window_bounds = array<i64: 232, 32>}, {transform_indices = @transform_2, window_bounds = array<i64: 1, 8, 2>}]} {
    %c0 = arith.constant 0 : index
    %c0_0 = arith.constant 0 : index
    %0 = vector.load %arg2[%c0, %c0_0] : memref<232x32xf32, #tpu.memory_space<vmem>>, vector<16x32xf32>
    %c0_1 = arith.constant 0 : index
    %c0_2 = arith.constant 0 : index
    %c0_3 = arith.constant 0 : index
    %1 = vector.load %arg1[%c0_1, %c0_2, %c0_3] : memref<1x8x16xf32, #tpu.memory_space<vmem>>, vector<1x8x16xf32>
    %2 = vector.shape_cast %1 : vector<1x8x16xf32> to vector<8x16xf32>
    %cst = arith.constant dense<0.000000e+00> : vector<8x32xf32>
    %3 = tpu.matmul %2, %0, %cst {dimension_numbers = #tpu.dot_dimension_numbers<[1], [0], [0], [1], [0, 0, 1, 1], [], []>} : vector<8x16xf32>, vector<16x32xf32>, vector<8x32xf32> -> vector<8x32xf32>
    %4 = arith.mulf %3, %3 : vector<8x32xf32>
    %5 = tpu.concatenate %3, %4 in 1 : vector<8x32xf32>, vector<8x32xf32> -> vector<8x64xf32>
    %cst_4 = arith.constant dense<0.000000e+00> : vector<64xf32>
    %6 = vector.multi_reduction <add>, %5, %cst_4 [0] : vector<8x64xf32> to vector<64xf32>
    %7 = vector.shape_cast %6 : vector<64xf32> to vector<1x64xf32>
    %cst_5 = arith.constant 1.250000e-01 : f32
    %8 = vector.broadcast %cst_5 : f32 to vector<1x64xf32>
    %9 = arith.mulf %7, %8 : vector<1x64xf32>
    %10 = vector.extract_strided_slice %9 {offsets = [0, 0], sizes = [1, 32], strides = [1, 1]} : vector<1x64xf32> to vector<1x32xf32>
    %11 = vector.extract_strided_slice %9 {offsets = [0, 32], sizes = [1, 32], strides = [1, 1]} : vector<1x64xf32> to vector<1x32xf32>
    %12 = arith.mulf %10, %10 : vector<1x32xf32>
    %13 = arith.subf %11, %12 : vector<1x32xf32>
    %cst_6 = arith.constant 0.000000e+00 : f32
    %14 = vector.broadcast %cst_6 : f32 to vector<1x32xf32>
    %15 = arith.maximumf %13, %14 : vector<1x32xf32>
    %c208 = arith.constant 208 : index
    %c0_7 = arith.constant 0 : index
    %16 = vector.load %arg2[%c208, %c0_7] : memref<232x32xf32, #tpu.memory_space<vmem>>, vector<2x32xf32>
    %17 = vector.extract_strided_slice %16 {offsets = [0, 0], sizes = [1, 32], strides = [1, 1]} : vector<2x32xf32> to vector<1x32xf32>
    %18 = vector.extract_strided_slice %16 {offsets = [1, 0], sizes = [1, 32], strides = [1, 1]} : vector<2x32xf32> to vector<1x32xf32>
    %cst_8 = arith.constant 9.99999974E-6 : f32
    %19 = vector.broadcast %cst_8 : f32 to vector<1x32xf32>
    %20 = arith.addf %15, %19 : vector<1x32xf32>
    %21 = math.rsqrt %20 : vector<1x32xf32>
    %22 = arith.mulf %17, %21 : vector<1x32xf32>
    %23 = arith.mulf %10, %22 : vector<1x32xf32>
    %24 = arith.subf %18, %23 : vector<1x32xf32>
    %25 = vector.broadcast %22 : vector<1x32xf32> to vector<8x32xf32>
    %26 = arith.mulf %3, %25 : vector<8x32xf32>
    %27 = vector.broadcast %24 : vector<1x32xf32> to vector<8x32xf32>
    %28 = arith.addf %26, %27 : vector<8x32xf32>
    %cst_9 = arith.constant 0.000000e+00 : f32
    %29 = vector.broadcast %cst_9 : f32 to vector<8x32xf32>
    %30 = arith.maximumf %28, %29 : vector<8x32xf32>
    %c16 = arith.constant 16 : index
    %c0_10 = arith.constant 0 : index
    %31 = vector.load %arg2[%c16, %c0_10] : memref<232x32xf32, #tpu.memory_space<vmem>>, vector<32x32xf32>
    %cst_11 = arith.constant dense<0.000000e+00> : vector<8x32xf32>
    %32 = tpu.matmul %30, %31, %cst_11 {dimension_numbers = #tpu.dot_dimension_numbers<[1], [0], [0], [1], [0, 0, 1, 1], [], []>} : vector<8x32xf32>, vector<32x32xf32>, vector<8x32xf32> -> vector<8x32xf32>
    %33 = arith.mulf %32, %32 : vector<8x32xf32>
    %34 = tpu.concatenate %32, %33 in 1 : vector<8x32xf32>, vector<8x32xf32> -> vector<8x64xf32>
    %cst_12 = arith.constant dense<0.000000e+00> : vector<64xf32>
    %35 = vector.multi_reduction <add>, %34, %cst_12 [0] : vector<8x64xf32> to vector<64xf32>
    %36 = vector.shape_cast %35 : vector<64xf32> to vector<1x64xf32>
    %cst_13 = arith.constant 1.250000e-01 : f32
    %37 = vector.broadcast %cst_13 : f32 to vector<1x64xf32>
    %38 = arith.mulf %36, %37 : vector<1x64xf32>
    %39 = vector.extract_strided_slice %38 {offsets = [0, 0], sizes = [1, 32], strides = [1, 1]} : vector<1x64xf32> to vector<1x32xf32>
    %40 = vector.extract_strided_slice %38 {offsets = [0, 32], sizes = [1, 32], strides = [1, 1]} : vector<1x64xf32> to vector<1x32xf32>
    %41 = arith.mulf %39, %39 : vector<1x32xf32>
    %42 = arith.subf %40, %41 : vector<1x32xf32>
    %cst_14 = arith.constant 0.000000e+00 : f32
    %43 = vector.broadcast %cst_14 : f32 to vector<1x32xf32>
    %44 = arith.maximumf %42, %43 : vector<1x32xf32>
    %c210 = arith.constant 210 : index
    %c0_15 = arith.constant 0 : index
    %45 = vector.load %arg2[%c210, %c0_15] : memref<232x32xf32, #tpu.memory_space<vmem>>, vector<2x32xf32>
    %46 = vector.extract_strided_slice %45 {offsets = [0, 0], sizes = [1, 32], strides = [1, 1]} : vector<2x32xf32> to vector<1x32xf32>
    %47 = vector.extract_strided_slice %45 {offsets = [1, 0], sizes = [1, 32], strides = [1, 1]} : vector<2x32xf32> to vector<1x32xf32>
    %cst_16 = arith.constant 9.99999974E-6 : f32
    %48 = vector.broadcast %cst_16 : f32 to vector<1x32xf32>
    %49 = arith.addf %44, %48 : vector<1x32xf32>
    %50 = math.rsqrt %49 : vector<1x32xf32>
    %51 = arith.mulf %46, %50 : vector<1x32xf32>
    %52 = arith.mulf %39, %51 : vector<1x32xf32>
    %53 = arith.subf %47, %52 : vector<1x32xf32>
    %54 = vector.broadcast %51 : vector<1x32xf32> to vector<8x32xf32>
    %55 = arith.mulf %32, %54 : vector<8x32xf32>
    %56 = vector.broadcast %53 : vector<1x32xf32> to vector<8x32xf32>
    %57 = arith.addf %55, %56 : vector<8x32xf32>
    %cst_17 = arith.constant 0.000000e+00 : f32
    %58 = vector.broadcast %cst_17 : f32 to vector<8x32xf32>
    %59 = arith.maximumf %57, %58 : vector<8x32xf32>
    %c48 = arith.constant 48 : index
    %c0_18 = arith.constant 0 : index
    %60 = vector.load %arg2[%c48, %c0_18] : memref<232x32xf32, #tpu.memory_space<vmem>>, vector<32x32xf32>
    %cst_19 = arith.constant dense<0.000000e+00> : vector<8x32xf32>
    %61 = tpu.matmul %59, %60, %cst_19 {dimension_numbers = #tpu.dot_dimension_numbers<[1], [0], [0], [1], [0, 0, 1, 1], [], []>} : vector<8x32xf32>, vector<32x32xf32>, vector<8x32xf32> -> vector<8x32xf32>
    %62 = arith.mulf %61, %61 : vector<8x32xf32>
    %63 = tpu.concatenate %61, %62 in 1 : vector<8x32xf32>, vector<8x32xf32> -> vector<8x64xf32>
    %cst_20 = arith.constant dense<0.000000e+00> : vector<64xf32>
    %64 = vector.multi_reduction <add>, %63, %cst_20 [0] : vector<8x64xf32> to vector<64xf32>
    %65 = vector.shape_cast %64 : vector<64xf32> to vector<1x64xf32>
    %cst_21 = arith.constant 1.250000e-01 : f32
    %66 = vector.broadcast %cst_21 : f32 to vector<1x64xf32>
    %67 = arith.mulf %65, %66 : vector<1x64xf32>
    %68 = vector.extract_strided_slice %67 {offsets = [0, 0], sizes = [1, 32], strides = [1, 1]} : vector<1x64xf32> to vector<1x32xf32>
    %69 = vector.extract_strided_slice %67 {offsets = [0, 32], sizes = [1, 32], strides = [1, 1]} : vector<1x64xf32> to vector<1x32xf32>
    %70 = arith.mulf %68, %68 : vector<1x32xf32>
    %71 = arith.subf %69, %70 : vector<1x32xf32>
    %cst_22 = arith.constant 0.000000e+00 : f32
    %72 = vector.broadcast %cst_22 : f32 to vector<1x32xf32>
    %73 = arith.maximumf %71, %72 : vector<1x32xf32>
    %c212 = arith.constant 212 : index
    %c0_23 = arith.constant 0 : index
    %74 = vector.load %arg2[%c212, %c0_23] : memref<232x32xf32, #tpu.memory_space<vmem>>, vector<2x32xf32>
    %75 = vector.extract_strided_slice %74 {offsets = [0, 0], sizes = [1, 32], strides = [1, 1]} : vector<2x32xf32> to vector<1x32xf32>
    %76 = vector.extract_strided_slice %74 {offsets = [1, 0], sizes = [1, 32], strides = [1, 1]} : vector<2x32xf32> to vector<1x32xf32>
    %cst_24 = arith.constant 9.99999974E-6 : f32
    %77 = vector.broadcast %cst_24 : f32 to vector<1x32xf32>
    %78 = arith.addf %73, %77 : vector<1x32xf32>
    %79 = math.rsqrt %78 : vector<1x32xf32>
    %80 = arith.mulf %75, %79 : vector<1x32xf32>
    %81 = arith.mulf %68, %80 : vector<1x32xf32>
    %82 = arith.subf %76, %81 : vector<1x32xf32>
    %83 = vector.broadcast %80 : vector<1x32xf32> to vector<8x32xf32>
    %84 = arith.mulf %61, %83 : vector<8x32xf32>
    %85 = vector.broadcast %82 : vector<1x32xf32> to vector<8x32xf32>
    %86 = arith.addf %84, %85 : vector<8x32xf32>
    %cst_25 = arith.constant 0.000000e+00 : f32
    %87 = vector.broadcast %cst_25 : f32 to vector<8x32xf32>
    %88 = arith.maximumf %86, %87 : vector<8x32xf32>
    %c80 = arith.constant 80 : index
    %c0_26 = arith.constant 0 : index
    %89 = vector.load %arg2[%c80, %c0_26] : memref<232x32xf32, #tpu.memory_space<vmem>>, vector<32x32xf32>
    %cst_27 = arith.constant dense<0.000000e+00> : vector<8x32xf32>
    %90 = tpu.matmul %88, %89, %cst_27 {dimension_numbers = #tpu.dot_dimension_numbers<[1], [0], [0], [1], [0, 0, 1, 1], [], []>} : vector<8x32xf32>, vector<32x32xf32>, vector<8x32xf32> -> vector<8x32xf32>
    %91 = arith.mulf %90, %90 : vector<8x32xf32>
    %92 = tpu.concatenate %90, %91 in 1 : vector<8x32xf32>, vector<8x32xf32> -> vector<8x64xf32>
    %cst_28 = arith.constant dense<0.000000e+00> : vector<64xf32>
    %93 = vector.multi_reduction <add>, %92, %cst_28 [0] : vector<8x64xf32> to vector<64xf32>
    %94 = vector.shape_cast %93 : vector<64xf32> to vector<1x64xf32>
    %cst_29 = arith.constant 1.250000e-01 : f32
    %95 = vector.broadcast %cst_29 : f32 to vector<1x64xf32>
    %96 = arith.mulf %94, %95 : vector<1x64xf32>
    %97 = vector.extract_strided_slice %96 {offsets = [0, 0], sizes = [1, 32], strides = [1, 1]} : vector<1x64xf32> to vector<1x32xf32>
    %98 = vector.extract_strided_slice %96 {offsets = [0, 32], sizes = [1, 32], strides = [1, 1]} : vector<1x64xf32> to vector<1x32xf32>
    %99 = arith.mulf %97, %97 : vector<1x32xf32>
    %100 = arith.subf %98, %99 : vector<1x32xf32>
    %cst_30 = arith.constant 0.000000e+00 : f32
    %101 = vector.broadcast %cst_30 : f32 to vector<1x32xf32>
    %102 = arith.maximumf %100, %101 : vector<1x32xf32>
    %c214 = arith.constant 214 : index
    %c0_31 = arith.constant 0 : index
    %103 = vector.load %arg2[%c214, %c0_31] : memref<232x32xf32, #tpu.memory_space<vmem>>, vector<2x32xf32>
    %104 = vector.extract_strided_slice %103 {offsets = [0, 0], sizes = [1, 32], strides = [1, 1]} : vector<2x32xf32> to vector<1x32xf32>
    %105 = vector.extract_strided_slice %103 {offsets = [1, 0], sizes = [1, 32], strides = [1, 1]} : vector<2x32xf32> to vector<1x32xf32>
    %cst_32 = arith.constant 9.99999974E-6 : f32
    %106 = vector.broadcast %cst_32 : f32 to vector<1x32xf32>
    %107 = arith.addf %102, %106 : vector<1x32xf32>
    %108 = math.rsqrt %107 : vector<1x32xf32>
    %109 = arith.mulf %104, %108 : vector<1x32xf32>
    %110 = arith.mulf %97, %109 : vector<1x32xf32>
    %111 = arith.subf %105, %110 : vector<1x32xf32>
    %112 = vector.broadcast %109 : vector<1x32xf32> to vector<8x32xf32>
    %113 = arith.mulf %90, %112 : vector<8x32xf32>
    %114 = vector.broadcast %111 : vector<1x32xf32> to vector<8x32xf32>
    %115 = arith.addf %113, %114 : vector<8x32xf32>
    %cst_33 = arith.constant 0.000000e+00 : f32
    %116 = vector.broadcast %cst_33 : f32 to vector<8x32xf32>
    %117 = arith.maximumf %115, %116 : vector<8x32xf32>
    %c112 = arith.constant 112 : index
    %c0_34 = arith.constant 0 : index
    %118 = vector.load %arg2[%c112, %c0_34] : memref<232x32xf32, #tpu.memory_space<vmem>>, vector<32x32xf32>
    %cst_35 = arith.constant dense<0.000000e+00> : vector<8x32xf32>
    %119 = tpu.matmul %117, %118, %cst_35 {dimension_numbers = #tpu.dot_dimension_numbers<[1], [0], [0], [1], [0, 0, 1, 1], [], []>} : vector<8x32xf32>, vector<32x32xf32>, vector<8x32xf32> -> vector<8x32xf32>
    %120 = arith.mulf %119, %119 : vector<8x32xf32>
    %121 = tpu.concatenate %119, %120 in 1 : vector<8x32xf32>, vector<8x32xf32> -> vector<8x64xf32>
    %cst_36 = arith.constant dense<0.000000e+00> : vector<64xf32>
    %122 = vector.multi_reduction <add>, %121, %cst_36 [0] : vector<8x64xf32> to vector<64xf32>
    %123 = vector.shape_cast %122 : vector<64xf32> to vector<1x64xf32>
    %cst_37 = arith.constant 1.250000e-01 : f32
    %124 = vector.broadcast %cst_37 : f32 to vector<1x64xf32>
    %125 = arith.mulf %123, %124 : vector<1x64xf32>
    %126 = vector.extract_strided_slice %125 {offsets = [0, 0], sizes = [1, 32], strides = [1, 1]} : vector<1x64xf32> to vector<1x32xf32>
    %127 = vector.extract_strided_slice %125 {offsets = [0, 32], sizes = [1, 32], strides = [1, 1]} : vector<1x64xf32> to vector<1x32xf32>
    %128 = arith.mulf %126, %126 : vector<1x32xf32>
    %129 = arith.subf %127, %128 : vector<1x32xf32>
    %cst_38 = arith.constant 0.000000e+00 : f32
    %130 = vector.broadcast %cst_38 : f32 to vector<1x32xf32>
    %131 = arith.maximumf %129, %130 : vector<1x32xf32>
    %c216 = arith.constant 216 : index
    %c0_39 = arith.constant 0 : index
    %132 = vector.load %arg2[%c216, %c0_39] : memref<232x32xf32, #tpu.memory_space<vmem>>, vector<2x32xf32>
    %133 = vector.extract_strided_slice %132 {offsets = [0, 0], sizes = [1, 32], strides = [1, 1]} : vector<2x32xf32> to vector<1x32xf32>
    %134 = vector.extract_strided_slice %132 {offsets = [1, 0], sizes = [1, 32], strides = [1, 1]} : vector<2x32xf32> to vector<1x32xf32>
    %cst_40 = arith.constant 9.99999974E-6 : f32
    %135 = vector.broadcast %cst_40 : f32 to vector<1x32xf32>
    %136 = arith.addf %131, %135 : vector<1x32xf32>
    %137 = math.rsqrt %136 : vector<1x32xf32>
    %138 = arith.mulf %133, %137 : vector<1x32xf32>
    %139 = arith.mulf %126, %138 : vector<1x32xf32>
    %140 = arith.subf %134, %139 : vector<1x32xf32>
    %141 = vector.broadcast %138 : vector<1x32xf32> to vector<8x32xf32>
    %142 = arith.mulf %119, %141 : vector<8x32xf32>
    %143 = vector.broadcast %140 : vector<1x32xf32> to vector<8x32xf32>
    %144 = arith.addf %142, %143 : vector<8x32xf32>
    %cst_41 = arith.constant 0.000000e+00 : f32
    %145 = vector.broadcast %cst_41 : f32 to vector<8x32xf32>
    %146 = arith.maximumf %144, %145 : vector<8x32xf32>
    %c144 = arith.constant 144 : index
    %c0_42 = arith.constant 0 : index
    %147 = vector.load %arg2[%c144, %c0_42] : memref<232x32xf32, #tpu.memory_space<vmem>>, vector<32x32xf32>
    %cst_43 = arith.constant dense<0.000000e+00> : vector<8x32xf32>
    %148 = tpu.matmul %146, %147, %cst_43 {dimension_numbers = #tpu.dot_dimension_numbers<[1], [0], [0], [1], [0, 0, 1, 1], [], []>} : vector<8x32xf32>, vector<32x32xf32>, vector<8x32xf32> -> vector<8x32xf32>
    %149 = arith.mulf %148, %148 : vector<8x32xf32>
    %150 = tpu.concatenate %148, %149 in 1 : vector<8x32xf32>, vector<8x32xf32> -> vector<8x64xf32>
    %cst_44 = arith.constant dense<0.000000e+00> : vector<64xf32>
    %151 = vector.multi_reduction <add>, %150, %cst_44 [0] : vector<8x64xf32> to vector<64xf32>
    %152 = vector.shape_cast %151 : vector<64xf32> to vector<1x64xf32>
    %cst_45 = arith.constant 1.250000e-01 : f32
    %153 = vector.broadcast %cst_45 : f32 to vector<1x64xf32>
    %154 = arith.mulf %152, %153 : vector<1x64xf32>
    %155 = vector.extract_strided_slice %154 {offsets = [0, 0], sizes = [1, 32], strides = [1, 1]} : vector<1x64xf32> to vector<1x32xf32>
    %156 = vector.extract_strided_slice %154 {offsets = [0, 32], sizes = [1, 32], strides = [1, 1]} : vector<1x64xf32> to vector<1x32xf32>
    %157 = arith.mulf %155, %155 : vector<1x32xf32>
    %158 = arith.subf %156, %157 : vector<1x32xf32>
    %cst_46 = arith.constant 0.000000e+00 : f32
    %159 = vector.broadcast %cst_46 : f32 to vector<1x32xf32>
    %160 = arith.maximumf %158, %159 : vector<1x32xf32>
    %c218 = arith.constant 218 : index
    %c0_47 = arith.constant 0 : index
    %161 = vector.load %arg2[%c218, %c0_47] : memref<232x32xf32, #tpu.memory_space<vmem>>, vector<2x32xf32>
    %162 = vector.extract_strided_slice %161 {offsets = [0, 0], sizes = [1, 32], strides = [1, 1]} : vector<2x32xf32> to vector<1x32xf32>
    %163 = vector.extract_strided_slice %161 {offsets = [1, 0], sizes = [1, 32], strides = [1, 1]} : vector<2x32xf32> to vector<1x32xf32>
    %cst_48 = arith.constant 9.99999974E-6 : f32
    %164 = vector.broadcast %cst_48 : f32 to vector<1x32xf32>
    %165 = arith.addf %160, %164 : vector<1x32xf32>
    %166 = math.rsqrt %165 : vector<1x32xf32>
    %167 = arith.mulf %162, %166 : vector<1x32xf32>
    %168 = arith.mulf %155, %167 : vector<1x32xf32>
    %169 = arith.subf %163, %168 : vector<1x32xf32>
    %170 = vector.broadcast %167 : vector<1x32xf32> to vector<8x32xf32>
    %171 = arith.mulf %148, %170 : vector<8x32xf32>
    %172 = vector.broadcast %169 : vector<1x32xf32> to vector<8x32xf32>
    %173 = arith.addf %171, %172 : vector<8x32xf32>
    %cst_49 = arith.constant 0.000000e+00 : f32
    %174 = vector.broadcast %cst_49 : f32 to vector<8x32xf32>
    %175 = arith.maximumf %173, %174 : vector<8x32xf32>
    %c176 = arith.constant 176 : index
    %c0_50 = arith.constant 0 : index
    %176 = vector.load %arg2[%c176, %c0_50] : memref<232x32xf32, #tpu.memory_space<vmem>>, vector<32x32xf32>
    %cst_51 = arith.constant dense<0.000000e+00> : vector<8x32xf32>
    %177 = tpu.matmul %175, %176, %cst_51 {dimension_numbers = #tpu.dot_dimension_numbers<[1], [0], [0], [1], [0, 0, 1, 1], [], []>} : vector<8x32xf32>, vector<32x32xf32>, vector<8x32xf32> -> vector<8x32xf32>
    %178 = arith.mulf %177, %177 : vector<8x32xf32>
    %179 = tpu.concatenate %177, %178 in 1 : vector<8x32xf32>, vector<8x32xf32> -> vector<8x64xf32>
    %cst_52 = arith.constant dense<0.000000e+00> : vector<64xf32>
    %180 = vector.multi_reduction <add>, %179, %cst_52 [0] : vector<8x64xf32> to vector<64xf32>
    %181 = vector.shape_cast %180 : vector<64xf32> to vector<1x64xf32>
    %cst_53 = arith.constant 1.250000e-01 : f32
    %182 = vector.broadcast %cst_53 : f32 to vector<1x64xf32>
    %183 = arith.mulf %181, %182 : vector<1x64xf32>
    %184 = vector.extract_strided_slice %183 {offsets = [0, 0], sizes = [1, 32], strides = [1, 1]} : vector<1x64xf32> to vector<1x32xf32>
    %185 = vector.extract_strided_slice %183 {offsets = [0, 32], sizes = [1, 32], strides = [1, 1]} : vector<1x64xf32> to vector<1x32xf32>
    %186 = arith.mulf %184, %184 : vector<1x32xf32>
    %187 = arith.subf %185, %186 : vector<1x32xf32>
    %cst_54 = arith.constant 0.000000e+00 : f32
    %188 = vector.broadcast %cst_54 : f32 to vector<1x32xf32>
    %189 = arith.maximumf %187, %188 : vector<1x32xf32>
    %c220 = arith.constant 220 : index
    %c0_55 = arith.constant 0 : index
    %190 = vector.load %arg2[%c220, %c0_55] : memref<232x32xf32, #tpu.memory_space<vmem>>, vector<2x32xf32>
    %191 = vector.extract_strided_slice %190 {offsets = [0, 0], sizes = [1, 32], strides = [1, 1]} : vector<2x32xf32> to vector<1x32xf32>
    %192 = vector.extract_strided_slice %190 {offsets = [1, 0], sizes = [1, 32], strides = [1, 1]} : vector<2x32xf32> to vector<1x32xf32>
    %cst_56 = arith.constant 9.99999974E-6 : f32
    %193 = vector.broadcast %cst_56 : f32 to vector<1x32xf32>
    %194 = arith.addf %189, %193 : vector<1x32xf32>
    %195 = math.rsqrt %194 : vector<1x32xf32>
    %196 = arith.mulf %191, %195 : vector<1x32xf32>
    %197 = arith.mulf %184, %196 : vector<1x32xf32>
    %198 = arith.subf %192, %197 : vector<1x32xf32>
    %199 = vector.broadcast %196 : vector<1x32xf32> to vector<8x32xf32>
    %200 = arith.mulf %177, %199 : vector<8x32xf32>
    %201 = vector.broadcast %198 : vector<1x32xf32> to vector<8x32xf32>
    %202 = arith.addf %200, %201 : vector<8x32xf32>
    %cst_57 = arith.constant 0.000000e+00 : f32
    %203 = vector.broadcast %cst_57 : f32 to vector<8x32xf32>
    %204 = arith.maximumf %202, %203 : vector<8x32xf32>
    %c224 = arith.constant 224 : index
    %c0_58 = arith.constant 0 : index
    %205 = vector.load %arg2[%c224, %c0_58] : memref<232x32xf32, #tpu.memory_space<vmem>>, vector<2x32xf32>
    %c226 = arith.constant 226 : index
    %c0_59 = arith.constant 0 : index
    %206 = vector.load %arg2[%c226, %c0_59] : memref<232x32xf32, #tpu.memory_space<vmem>>, vector<1x32xf32>
    %207 = vector.extract_strided_slice %206 {offsets = [0, 0], sizes = [1, 2], strides = [1, 1]} : vector<1x32xf32> to vector<1x2xf32>
    %cst_60 = arith.constant dense<0.000000e+00> : vector<8x2xf32>
    %208 = tpu.matmul %204, %205, %cst_60 {dimension_numbers = #tpu.dot_dimension_numbers<[1], [1], [0], [0], [0, 0, 1, 0], [], []>} : vector<8x32xf32>, vector<2x32xf32>, vector<8x2xf32> -> vector<8x2xf32>
    %209 = vector.broadcast %207 : vector<1x2xf32> to vector<8x2xf32>
    %210 = arith.addf %208, %209 : vector<8x2xf32>
    %cst_61 = arith.constant dense<0xFF800000> : vector<8xf32>
    %211 = vector.multi_reduction <maximumf>, %210, %cst_61 [1] : vector<8x2xf32> to vector<8xf32>
    %212 = vector.shape_cast %211 : vector<8xf32> to vector<8x1xf32>
    %213 = vector.broadcast %212 : vector<8x1xf32> to vector<8x2xf32>
    %214 = arith.subf %210, %213 : vector<8x2xf32>
    %215 = math.exp %214 : vector<8x2xf32>
    %cst_62 = arith.constant dense<0.000000e+00> : vector<8xf32>
    %216 = vector.multi_reduction <add>, %215, %cst_62 [1] : vector<8x2xf32> to vector<8xf32>
    %217 = vector.shape_cast %216 : vector<8xf32> to vector<8x1xf32>
    %218 = vector.broadcast %217 : vector<8x1xf32> to vector<8x2xf32>
    %219 = arith.divf %215, %218 : vector<8x2xf32>
    %c0_63 = arith.constant 0 : index
    %c0_64 = arith.constant 0 : index
    %c0_65 = arith.constant 0 : index
    %220 = vector.load %arg3[%c0_63, %c0_64, %c0_65] : memref<1x8x2xf32, #tpu.memory_space<vmem>>, vector<1x8x2xf32>
    %221 = vector.shape_cast %220 : vector<1x8x2xf32> to vector<8x2xf32>
    %222 = vector.shape_cast %219 : vector<8x2xf32> to vector<1x8x2xf32>
    tpu.vector_store %arg3[%c0_63, %c0_64, %c0_65], %222 {strides = array<i32>} : memref<1x8x2xf32, #tpu.memory_space<vmem>>, vector<1x8x2xf32>,
    return
  }
  func.func @transform_0(%arg0: i32) -> (i32, i32, i32) {
    %c0_i32 = arith.constant 0 : i32
    %c0_i32_0 = arith.constant 0 : i32
    %c0_i32_1 = arith.constant 0 : i32
    return %arg0, %c0_i32, %c0_i32_0 : i32, i32, i32
  }
  func.func @transform_1(%arg0: i32) -> (i32, i32) {
    %c0_i32 = arith.constant 0 : i32
    %c0_i32_0 = arith.constant 0 : i32
    %c0_i32_1 = arith.constant 0 : i32
    return %c0_i32, %c0_i32_0 : i32, i32
  }
  func.func @transform_2(%arg0: i32) -> (i32, i32, i32) {
    %c0_i32 = arith.constant 0 : i32
    %c0_i32_0 = arith.constant 0 : i32
    %c0_i32_1 = arith.constant 0 : i32
    return %arg0, %c0_i32, %c0_i32_0 : i32, i32, i32
  }
}

</mosaic_0001>

<llo_original>
// kernel: mlp_mach5_forward_batched.1
$region0: #{mlp_mach5_forward_batched.1}
  #allocation0 [shape = 'u32[]', space=smem, size = 0x4, offset = 0x4, fixed_abs, tag = 'smem constant byte address 0x4 - core index']
  #allocation1 [shape = 'u32[144,128]{1,0:T(1,128)}', space=vmem, size = 0x12000, scoped, tag = 'internal scratch']
  %s0 = inlined_call_operand.vmem [shape: f32[4,8,16], index: 0, kind: input, shape index: {}]
  %s1 = inlined_call_operand.vmem [shape: f32[232,32], index: 1, kind: input, shape index: {}]
  %s2 = inlined_call_operand.vmem [shape: f32[4,8,2], index: 2, kind: output, shape index: {}]
  %s3 = sld [smem:[#allocation0]]
  $region41: #{mlp_mach5_forward_batched.1} parent=0
    _
  %s5 = ssub.s32 1, %s3
  %s6 = scalar_select 0, %s5, %s3
  loop: start=0, step=1, limit=6
  $region2: #{mlp_mach5_forward_batched.1} parent=0 // loop_pre_header
    _
  $region3: #{mlp_mach5_forward_batched.1} parent=0 // loop_header
    %s8 = sphi 0, %s12
    %p9 = scmp.ge.s32.totalorder %s8, 6
    %s18 = sphi 0, %s20
    %s21 = sphi 0, %s18
    %s22 = sphi 0, %s21
    %s38 = sphi 0, %s22
    %s42 = sphi 0, %s42
    %s44 = sphi 0, %s42
    %s45 = sphi 0, %s44
    %s59 = sphi 0, %s45
    %s65 = sphi 0, %s67
    %s68 = sphi 0, %s65
    %s69 = sphi 0, %s68
    %s85 = sphi 0, %s69
  $region4: #{mlp_mach5_forward_batched.1} parent=0 // loop_header_branch
    %11 = sbr.rel (%p9) target = $region8
  $region5: #{mlp_mach5_forward_batched.1} parent=0 // loop_body
    %s13 = ssub.s32 %s8, 1
    %s14 = ssub.s32 %s8, 2
    %s15 = sadd.s32 %s8, 1
    %s16 = ssub.s32 %s8, %s15
    %p17 = scmp.eq.s32.totalorder %s16, 0
    %s19 = sadd.s32 %s18, 1
    %s20 = scalar_select %p17, %s18, %s19
    %p23 = pneg %p17
    %p24 = scmp.eq.s32.totalorder %s8, 3
    %p25 = por %p23, %p24
    %p26 = scmp.ne.s32.totalorder %s18, %s21
    %p27 = scmp.eq.s32.totalorder %s8, 0
    %p28 = por %p26, %p27
    %p29 = scmp.ne.s32.totalorder %s18, %s21
    %p30 = scmp.eq.s32.totalorder %s13, 3
    %p31 = por %p29, %p30
    %p32 = scmp.ne.s32.totalorder %s21, %s22
    %p33 = scmp.eq.s32.totalorder %s13, 0
    %p34 = por %p32, %p33
    %p35 = scmp.ne.s32.totalorder %s21, %s22
    %p36 = scmp.eq.s32.totalorder %s14, 3
    %p37 = por %p35, %p36
    %p39 = scmp.ne.s32.totalorder %s22, %s38
    %p40 = scmp.eq.s32.totalorder %s14, 0
    %p41 = por %p39, %p40
    %s43 = sadd.s32 %s42, 1
    %p46 = scmp.eq.s32.totalorder %s8, 3
    %p47 = scmp.ne.s32.totalorder %s42, %s44
    %p48 = scmp.eq.s32.totalorder %s8, 0
    %p49 = por %p47, %p48
    %p50 = scmp.ne.s32.totalorder %s42, %s44
    %p51 = scmp.eq.s32.totalorder %s13, 3
    %p52 = por %p50, %p51
    %p53 = scmp.ne.s32.totalorder %s44, %s45
    %p54 = scmp.eq.s32.totalorder %s13, 0
    %p55 = por %p53, %p54
    %p56 = scmp.ne.s32.totalorder %s44, %s45
    %p57 = scmp.eq.s32.totalorder %s14, 3
    %p58 = por %p56, %p57
    %p60 = scmp.ne.s32.totalorder %s45, %s59
    %p61 = scmp.eq.s32.totalorder %s14, 0
    %p62 = por %p60, %p61
    %s63 = ssub.s32 %s8, %s15
    %p64 = scmp.eq.s32.totalorder %s63, 0
    %s66 = sadd.s32 %s65, 1
    %s67 = scalar_select %p64, %s65, %s66
    %p70 = pneg %p64
    %p71 = scmp.eq.s32.totalorder %s8, 3
    %p72 = por %p70, %p71
    %p73 = scmp.ne.s32.totalorder %s65, %s68
    %p74 = scmp.eq.s32.totalorder %s8, 0
    %p75 = por %p73, %p74
    %p76 = scmp.ne.s32.totalorder %s65, %s68
    %p77 = scmp.eq.s32.totalorder %s13, 3
    %p78 = por %p76, %p77
    %p79 = scmp.ne.s32.totalorder %s68, %s69
    %p80 = scmp.eq.s32.totalorder %s13, 0
    %p81 = por %p79, %p80
    %p82 = scmp.ne.s32.totalorder %s68, %s69
    %p83 = scmp.eq.s32.totalorder %s14, 3
    %p84 = por %p82, %p83
    %p86 = scmp.ne.s32.totalorder %s69, %s85
    %p87 = scmp.eq.s32.totalorder %s14, 0
    %p88 = por %p86, %p87
    %p89 = scmp.le.s32.totalorder 1, %s8
    %p90 = scmp.lt.s32.totalorder %s8, 5
    %p91 = pnand %p89, %p90
    %p92 = pneg %p91
    // Predicated region
    $region9: #{mlp_mach5_forward_batched.1} parent=5 // pred_check
      _
    $region10: #{mlp_mach5_forward_batched.1} parent=5 // pred_check_branch
      %94 = sbr.rel (%p91) target = $region12
    $region11: #{mlp_mach5_forward_batched.1} parent=5 // pred_region
      %s95 = ssub.s32 %s8, 1
      // Predicated region
      $region13: #{mlp_mach5_forward_batched.1} parent=11 // pred_check
        %p96 = pneg %p55
      $region14: #{mlp_mach5_forward_batched.1} parent=11 // pred_check_branch
        %98 = sbr.rel (%p96) target = $region16
      $region15: #{mlp_mach5_forward_batched.1} parent=11 // pred_region
        _
      $region16: #{mlp_mach5_forward_batched.1} parent=11 // pred_fallthru
        _
    $region12: #{mlp_mach5_forward_batched.1} parent=5 // pred_fallthru
      _
    %p99 = scmp.lt.s32.totalorder %s8, 4
    // Predicated region
    $region17: #{mlp_mach5_forward_batched.1} parent=5 // pred_check
      %p100 = pneg %p99
    $region18: #{mlp_mach5_forward_batched.1} parent=5 // pred_check_branch
      %102 = sbr.rel (%p100) target = $region20
    $region19: #{mlp_mach5_forward_batched.1} parent=5 // pred_region
      // Predicated region
      $region21: #{mlp_mach5_forward_batched.1} parent=19 // pred_check
        %p103 = pneg %p28
      $region22: #{mlp_mach5_forward_batched.1} parent=19 // pred_check_branch
        %105 = sbr.rel (%p103) target = $region24
      $region23: #{mlp_mach5_forward_batched.1} parent=19 // pred_region
        %p106 = scmp.lt.s32.totalorder %s8, 3
        %s107 = scalar_select %p106, %s8, 3
        %s108 = smul.addr %s107, 8
        %s109 = scalar_lea.vmem %s0, %s108
      $region24: #{mlp_mach5_forward_batched.1} parent=19 // pred_fallthru
        _
    $region20: #{mlp_mach5_forward_batched.1} parent=5 // pred_fallthru
      _
    %p110 = scmp.le.s32.totalorder 1, %s8
    %p111 = scmp.lt.s32.totalorder %s8, 5
    %p112 = pnand %p110, %p111
    %p113 = pneg %p112
    // Predicated region
    $region25: #{mlp_mach5_forward_batched.1} parent=5 // pred_check
      _
    $region26: #{mlp_mach5_forward_batched.1} parent=5 // pred_check_branch
      %115 = sbr.rel (%p112) target = $region28
    $region27: #{mlp_mach5_forward_batched.1} parent=5 // pred_region
      %s116 = ssub.s32 %s8, 1
      %p117 = scmp.lt.s32.totalorder %s13, 3
      %s118 = scalar_select %p117, %s13, 3
      %s119 = smul.addr %s118, 8
      %s120 = scalar_lea.vmem %s0, %s119
      %p121 = pneg %p34
      %p122 = pneg %p31
      %p123 = pneg %p55
      %p124 = pneg %p52
      %p125 = pneg %p81
      %p126 = pneg %p78
      %p127 = scmp.lt.s32.totalorder %s13, 3
      %s128 = scalar_select %p127, %s13, 3
      %s129 = smul.addr %s128, 8
      %s130 = scalar_lea.vmem %s2, %s129
      %p131 = scmp.lt.s32.totalorder %s13, 3
      %s132 = scalar_select %p131, %s13, 3
      %s133 = smul.addr %s132, 8
      %s134 = scalar_lea.vmem %s0, %s133
      %p135 = scmp.lt.s32.totalorder %s13, 3
      %s136 = scalar_select %p135, %s13, 3
      %s137 = smul.addr %s136, 8
      %s138 = scalar_lea.vmem %s2, %s137
      %v139 = vld [vmem:[%s1] sm:$0xff]
      %v140 = vld [vmem:[%s1 + $0x8] sm:$0xff]
      %v141 = vld [vmem:[%s134] sm:$0xff]
      %vm142 = vcmask 130048
      %v144 = vsel %vm142, %v141, 0
      %146 = vmatprep.subr.mxu0 0.0
      %147 = vmatpush1.msra.mxu0 %v139
      %148 = vmatprep.subr.mxu0 0.0
      %149 = vmatpush1.msra.mxu0 %v140
      %150 = vmatprep.subr.mxu0 0.0
      %151 = vmatpush1.msra.mxu0 0.0
      %152 = vmatprep.subr.mxu0 0.0
      %153 = vmatpush1.msra.mxu0 0.0
      %154 = vmatprep.subr.mxu0 0.0
      %155 = vmatpush1.msra.mxu0 0.0
      %156 = vmatprep.subr.mxu0 0.0
      %157 = vmatpush1.msra.mxu0 0.0
      %158 = vmatprep.subr.mxu0 0.0
      %159 = vmatpush1.msra.mxu0 0.0
      %160 = vmatprep.subr.mxu0 0.0
      %161 = vmatpush1.msra.mxu0 0.0
      %162 = vmatprep.subr.mxu0 0.0
      %163 = vmatpush1.msra.mxu0 0.0
      %164 = vmatprep.subr.mxu0 0.0
      %165 = vmatpush1.msra.mxu0 0.0
      %166 = vmatprep.subr.mxu0 0.0
      %167 = vmatpush1.msra.mxu0 0.0
      %168 = vmatprep.subr.mxu0 0.0
      %169 = vmatpush1.msra.mxu0 0.0
      %170 = vmatprep.subr.mxu0 0.0
      %171 = vmatpush1.msra.mxu0 0.0
      %172 = vmatprep.subr.mxu0 0.0
      %173 = vmatpush1.msra.mxu0 0.0
      %174 = vmatprep.subr.mxu0 0.0
      %175 = vmatpush1.msra.mxu0 0.0
      %176 = vmatprep.subr.mxu0 0.0
      %177 = vmatpush1.msra.mxu0 0.0
      %178 = vmatprep.subr.mxu0 0.0
      %179 = vmatpush1.msra.mxu0 0.0
      %180 = vmatprep.subr.mxu0 0.0
      %181 = vmatpush1.msra.mxu0 0.0
      %182 = vmatprep.subr.mxu0 0.0
      %183 = vmatpush1.msra.mxu0 0.0
      %184 = vmatprep.subr.mxu0 0.0
      %185 = vmatpush1.msra.mxu0 0.0
      %186 = vmatprep.subr.mxu0 0.0
      %187 = vmatpush1.msra.mxu0 0.0
      %188 = vmatprep.subr.mxu0 0.0
      %189 = vmatpush1.msra.mxu0 0.0
      %190 = vmatprep.subr.mxu0 0.0
      %191 = vmatpush1.msra.mxu0 0.0
      %192 = vmatprep.subr.mxu0 0.0
      %193 = vmatpush1.msra.mxu0 0.0
      %194 = vmatprep.subr.mxu0 0.0
      %195 = vmatpush1.msra.mxu0 0.0
      %196 = vmatprep.subr.mxu0 0.0
      %197 = vmatpush1.msra.mxu0 0.0
      %198 = vmatprep.subr.mxu0 0.0
      %199 = vmatpush1.msra.mxu0 0.0
      %200 = vmatprep.subr.mxu0 0.0
      %201 = vmatpush1.msra.mxu0 0.0
      %202 = vmatprep.subr.mxu0 0.0
      %203 = vmatpush1.msra.mxu0 0.0
      %204 = vmatprep.subr.mxu0 0.0
      %205 = vmatpush1.msra.mxu0 0.0
      %206 = vmatprep.subr.mxu0 0.0
      %207 = vmatpush1.msra.mxu0 0.0
      %208 = vmatprep.subr.mxu0 0.0
      %209 = vmatpush1.msra.mxu0 0.0
      %210 = vmatprep.mubr.f32.mxu0 0.0
      %211 = vmatmul.mubr.f32.gmra.mrb[0].mxu0 %v144
      %v212 = vpop.f32.mrb[0].mxu0
      %v213 = vadd.f32 0.0, %v212
      %v214 = vpop.f32.mrb[0].mxu0
      %215 = vdwg.mxu0
      %v216 = vmul.f32 %v213, %v213
      %218 = vrot.lane.b32.xlu0 %v216, 32
      %v219 = vpop.permute.xlu0 %218
      %vm221 = vcmask 261120
      %v222 = vsel %vm221, %v213, %v219
      %vm223 = vcmask 523264
      %v224 = vsel %vm223, %v222, 0.0
      %v225 = vrot.slane %v224, 4
      %v226 = vadd.f32 %v224, %v225
      %v227 = vrot.slane %v226, 2
      %v228 = vadd.f32 %v226, %v227
      %v229 = vrot.slane %v228, 1
      %v230 = vadd.f32 %v228, %v229
      %v231 = vmul.f32 %v230, 0.125
      %v232 = vmul.f32 %v231, %v231
      %234 = vrot.lane.b32.xlu0 %v232, 32
      %v235 = vpop.permute.xlu0 %234
      %v237 = vsub.f32 %v231, %v235
      %v238 = vmax.f32 %v237, 0.0
      %v239 = vld [vmem:[%s1 + $0xd0] sm:$0x3]
      %v240 = vadd.f32 %v238, 1e-05
      %v241 = vrsqrt.pop %v240
      %243 = vrot.lane.b32.xlu0 %v241, 96
      %v244 = vpop.permute.xlu0 %243
      %v246 = vmul.f32 %v239, %v244
      %v247 = vmul.f32 %v231, %v246
      %v249 = vrot.slane %v247, 7
      %v251 = vsub.f32 %v239, %v249
      %v252 = vlaneseq
      %v253 = vshrl.u32 %v252, 7
      %v254 = vsub.s32 0, %v253
      %v255 = vrot.slane %v246, %v254
      %v256 = vmul.f32 %v213, %v255
      %v257 = vlaneseq
      %v258 = vshrl.u32 %v257, 7
      %v259 = vsub.s32 1, %v258
      %v260 = vrot.slane %v251, %v259
      %v261 = vadd.f32 %v256, %v260
      %v262 = vmax.f32 %v261, 0.0
      %v263 = vld [vmem:[%s1 + $0x10] sm:$0xff]
      %v264 = vld [vmem:[%s1 + $0x18] sm:$0xff]
      %v265 = vld [vmem:[%s1 + $0x20] sm:$0xff]
      %v266 = vld [vmem:[%s1 + $0x28] sm:$0xff]
      %v268 = vsel %vm221, %v262, 0
      %270 = vmatprep.subr.mxu0 0.0
      %271 = vmatpush1.msra.mxu0 %v263
      %272 = vmatprep.subr.mxu0 0.0
      %273 = vmatpush1.msra.mxu0 %v264
      %274 = vmatprep.subr.mxu0 0.0
      %275 = vmatpush1.msra.mxu0 %v265
      %276 = vmatprep.subr.mxu0 0.0
      %277 = vmatpush1.msra.mxu0 %v266
      %278 = vmatprep.subr.mxu0 0.0
      %279 = vmatpush1.msra.mxu0 0.0
      %280 = vmatprep.subr.mxu0 0.0
      %281 = vmatpush1.msra.mxu0 0.0
      %282 = vmatprep.subr.mxu0 0.0
      %283 = vmatpush1.msra.mxu0 0.0
      %284 = vmatprep.subr.mxu0 0.0
      %285 = vmatpush1.msra.mxu0 0.0
      %286 = vmatprep.subr.mxu0 0.0
      %287 = vmatpush1.msra.mxu0 0.0
      %288 = vmatprep.subr.mxu0 0.0
      %289 = vmatpush1.msra.mxu0 0.0
      %290 = vmatprep.subr.mxu0 0.0
      %291 = vmatpush1.msra.mxu0 0.0
      %292 = vmatprep.subr.mxu0 0.0
      %293 = vmatpush1.msra.mxu0 0.0
      %294 = vmatprep.subr.mxu0 0.0
      %295 = vmatpush1.msra.mxu0 0.0
      %296 = vmatprep.subr.mxu0 0.0
      %297 = vmatpush1.msra.mxu0 0.0
      %298 = vmatprep.subr.mxu0 0.0
      %299 = vmatpush1.msra.mxu0 0.0
      %300 = vmatprep.subr.mxu0 0.0
      %301 = vmatpush1.msra.mxu0 0.0
      %302 = vmatprep.subr.mxu0 0.0
      %303 = vmatpush1.msra.mxu0 0.0
      %304 = vmatprep.subr.mxu0 0.0
      %305 = vmatpush1.msra.mxu0 0.0
      %306 = vmatprep.subr.mxu0 0.0
      %307 = vmatpush1.msra.mxu0 0.0
      %308 = vmatprep.subr.mxu0 0.0
      %309 = vmatpush1.msra.mxu0 0.0
      %310 = vmatprep.subr.mxu0 0.0
      %311 = vmatpush1.msra.mxu0 0.0
      %312 = vmatprep.subr.mxu0 0.0
      %313 = vmatpush1.msra.mxu0 0.0
      %314 = vmatprep.subr.mxu0 0.0
      %315 = vmatpush1.msra.mxu0 0.0
      %316 = vmatprep.subr.mxu0 0.0
      %317 = vmatpush1.msra.mxu0 0.0
      %318 = vmatprep.subr.mxu0 0.0
      %319 = vmatpush1.msra.mxu0 0.0
      %320 = vmatprep.subr.mxu0 0.0
      %321 = vmatpush1.msra.mxu0 0.0
      %322 = vmatprep.subr.mxu0 0.0
      %323 = vmatpush1.msra.mxu0 0.0
      %324 = vmatprep.subr.mxu0 0.0
      %325 = vmatpush1.msra.mxu0 0.0
      %326 = vmatprep.subr.mxu0 0.0
      %327 = vmatpush1.msra.mxu0 0.0
      %328 = vmatprep.subr.mxu0 0.0
      %329 = vmatpush1.msra.mxu0 0.0
      %330 = vmatprep.subr.mxu0 0.0
      %331 = vmatpush1.msra.mxu0 0.0
      %332 = vmatprep.subr.mxu0 0.0
      %333 = vmatpush1.msra.mxu0 0.0
      %334 = vmatprep.mubr.f32.mxu0 0.0
      %335 = vmatmul.mubr.f32.gmra.mrb[0].mxu0 %v268
      %v336 = vpop.f32.mrb[0].mxu0
      %v337 = vadd.f32 0.0, %v336
      %v338 = vpop.f32.mrb[0].mxu0
      %339 = vdwg.mxu0
      %v340 = vmul.f32 %v337, %v337
      %342 = vrot.lane.b32.xlu0 %v340, 32
      %v343 = vpop.permute.xlu0 %342
      %v345 = vsel %vm221, %v337, %v343
      %v346 = vsel %vm223, %v345, 0.0
      %v347 = vrot.slane %v346, 4
      %v348 = vadd.f32 %v346, %v347
      %v349 = vrot.slane %v348, 2
      %v350 = vadd.f32 %v348, %v349
      %v351 = vrot.slane %v350, 1
      %v352 = vadd.f32 %v350, %v351
      %v353 = vmul.f32 %v352, 0.125
      %v354 = vmul.f32 %v353, %v353
      %356 = vrot.lane.b32.xlu0 %v354, 32
      %v357 = vpop.permute.xlu0 %356
      %v359 = vsub.f32 %v353, %v357
      %v360 = vmax.f32 %v359, 0.0
      %v361 = vld [vmem:[%s1 + $0xd2] sm:$0x3]
      %v362 = vadd.f32 %v360, 1e-05
      %v363 = vrsqrt.pop %v362
      %365 = vrot.lane.b32.xlu0 %v363, 96
      %v366 = vpop.permute.xlu0 %365
      %v368 = vmul.f32 %v361, %v366
      %v369 = vmul.f32 %v353, %v368
      %v371 = vrot.slane %v369, 7
      %v373 = vsub.f32 %v361, %v371
      %v374 = vlaneseq
      %v375 = vshrl.u32 %v374, 7
      %v376 = vsub.s32 0, %v375
      %v377 = vrot.slane %v368, %v376
      %v378 = vmul.f32 %v337, %v377
      %v379 = vlaneseq
      %v380 = vshrl.u32 %v379, 7
      %v381 = vsub.s32 1, %v380
      %v382 = vrot.slane %v373, %v381
      %v383 = vadd.f32 %v378, %v382
      %v384 = vmax.f32 %v383, 0.0
      %v385 = vld [vmem:[%s1 + $0x30] sm:$0xff]
      %v386 = vld [vmem:[%s1 + $0x38] sm:$0xff]
      %v387 = vld [vmem:[%s1 + $0x40] sm:$0xff]
      %v388 = vld [vmem:[%s1 + $0x48] sm:$0xff]
      %v390 = vsel %vm221, %v384, 0
      %392 = vmatprep.subr.mxu0 0.0
      %393 = vmatpush1.msra.mxu0 %v385
      %394 = vmatprep.subr.mxu0 0.0
      %395 = vmatpush1.msra.mxu0 %v386
      %396 = vmatprep.subr.mxu0 0.0
      %397 = vmatpush1.msra.mxu0 %v387
      %398 = vmatprep.subr.mxu0 0.0
      %399 = vmatpush1.msra.mxu0 %v388
      %400 = vmatprep.subr.mxu0 0.0
      %401 = vmatpush1.msra.mxu0 0.0
      %402 = vmatprep.subr.mxu0 0.0
      %403 = vmatpush1.msra.mxu0 0.0
      %404 = vmatprep.subr.mxu0 0.0
      %405 = vmatpush1.msra.mxu0 0.0
      %406 = vmatprep.subr.mxu0 0.0
      %407 = vmatpush1.msra.mxu0 0.0
      %408 = vmatprep.subr.mxu0 0.0
      %409 = vmatpush1.msra.mxu0 0.0
      %410 = vmatprep.subr.mxu0 0.0
      %411 = vmatpush1.msra.mxu0 0.0
      %412 = vmatprep.subr.mxu0 0.0
      %413 = vmatpush1.msra.mxu0 0.0
      %414 = vmatprep.subr.mxu0 0.0
      %415 = vmatpush1.msra.mxu0 0.0
      %416 = vmatprep.subr.mxu0 0.0
      %417 = vmatpush1.msra.mxu0 0.0
      %418 = vmatprep.subr.mxu0 0.0
      %419 = vmatpush1.msra.mxu0 0.0
      %420 = vmatprep.subr.mxu0 0.0
      %421 = vmatpush1.msra.mxu0 0.0
      %422 = vmatprep.subr.mxu0 0.0
      %423 = vmatpush1.msra.mxu0 0.0
      %424 = vmatprep.subr.mxu0 0.0
      %425 = vmatpush1.msra.mxu0 0.0
      %426 = vmatprep.subr.mxu0 0.0
      %427 = vmatpush1.msra.mxu0 0.0
      %428 = vmatprep.subr.mxu0 0.0
      %429 = vmatpush1.msra.mxu0 0.0
      %430 = vmatprep.subr.mxu0 0.0
      %431 = vmatpush1.msra.mxu0 0.0
      %432 = vmatprep.subr.mxu0 0.0
      %433 = vmatpush1.msra.mxu0 0.0
      %434 = vmatprep.subr.mxu0 0.0
      %435 = vmatpush1.msra.mxu0 0.0
      %436 = vmatprep.subr.mxu0 0.0
      %437 = vmatpush1.msra.mxu0 0.0
      %438 = vmatprep.subr.mxu0 0.0
      %439 = vmatpush1.msra.mxu0 0.0
      %440 = vmatprep.subr.mxu0 0.0
      %441 = vmatpush1.msra.mxu0 0.0
      %442 = vmatprep.subr.mxu0 0.0
      %443 = vmatpush1.msra.mxu0 0.0
      %444 = vmatprep.subr.mxu0 0.0
      %445 = vmatpush1.msra.mxu0 0.0
      %446 = vmatprep.subr.mxu0 0.0
      %447 = vmatpush1.msra.mxu0 0.0
      %448 = vmatprep.subr.mxu0 0.0
      %449 = vmatpush1.msra.mxu0 0.0
      %450 = vmatprep.subr.mxu0 0.0
      %451 = vmatpush1.msra.mxu0 0.0
      %452 = vmatprep.subr.mxu0 0.0
      %453 = vmatpush1.msra.mxu0 0.0
      %454 = vmatprep.subr.mxu0 0.0
      %455 = vmatpush1.msra.mxu0 0.0
      %456 = vmatprep.mubr.f32.mxu0 0.0
      %457 = vmatmul.mubr.f32.gmra.mrb[0].mxu0 %v390
      %v458 = vpop.f32.mrb[0].mxu0
      %v459 = vadd.f32 0.0, %v458
      %v460 = vpop.f32.mrb[0].mxu0
      %461 = vdwg.mxu0
      %v462 = vmul.f32 %v459, %v459
      %464 = vrot.lane.b32.xlu0 %v462, 32
      %v465 = vpop.permute.xlu0 %464
      %v467 = vsel %vm221, %v459, %v465
      %v468 = vsel %vm223, %v467, 0.0
      %v469 = vrot.slane %v468, 4
      %v470 = vadd.f32 %v468, %v469
      %v471 = vrot.slane %v470, 2
      %v472 = vadd.f32 %v470, %v471
      %v473 = vrot.slane %v472, 1
      %v474 = vadd.f32 %v472, %v473
      %v475 = vmul.f32 %v474, 0.125
      %v476 = vmul.f32 %v475, %v475
      %478 = vrot.lane.b32.xlu0 %v476, 32
      %v479 = vpop.permute.xlu0 %478
      %v481 = vsub.f32 %v475, %v479
      %v482 = vmax.f32 %v481, 0.0
      %v483 = vld [vmem:[%s1 + $0xd4] sm:$0x3]
      %v484 = vadd.f32 %v482, 1e-05
      %v485 = vrsqrt.pop %v484
      %487 = vrot.lane.b32.xlu0 %v485, 96
      %v488 = vpop.permute.xlu0 %487
      %v490 = vmul.f32 %v483, %v488
      %v491 = vmul.f32 %v475, %v490
      %v493 = vrot.slane %v491, 7
      %v495 = vsub.f32 %v483, %v493
      %v496 = vlaneseq
      %v497 = vshrl.u32 %v496, 7
      %v498 = vsub.s32 0, %v497
      %v499 = vrot.slane %v490, %v498
      %v500 = vmul.f32 %v459, %v499
      %v501 = vlaneseq
      %v502 = vshrl.u32 %v501, 7
      %v503 = vsub.s32 1, %v502
      %v504 = vrot.slane %v495, %v503
      %v505 = vadd.f32 %v500, %v504
      %v506 = vmax.f32 %v505, 0.0
      %v507 = vld [vmem:[%s1 + $0x50] sm:$0xff]
      %v508 = vld [vmem:[%s1 + $0x58] sm:$0xff]
      %v509 = vld [vmem:[%s1 + $0x60] sm:$0xff]
      %v510 = vld [vmem:[%s1 + $0x68] sm:$0xff]
      %v512 = vsel %vm221, %v506, 0
      %514 = vmatprep.subr.mxu0 0.0
      %515 = vmatpush1.msra.mxu0 %v507
      %516 = vmatprep.subr.mxu0 0.0
      %517 = vmatpush1.msra.mxu0 %v508
      %518 = vmatprep.subr.mxu0 0.0
      %519 = vmatpush1.msra.mxu0 %v509
      %520 = vmatprep.subr.mxu0 0.0
      %521 = vmatpush1.msra.mxu0 %v510
      %522 = vmatprep.subr.mxu0 0.0
      %523 = vmatpush1.msra.mxu0 0.0
      %524 = vmatprep.subr.mxu0 0.0
      %525 = vmatpush1.msra.mxu0 0.0
      %526 = vmatprep.subr.mxu0 0.0
      %527 = vmatpush1.msra.mxu0 0.0
      %528 = vmatprep.subr.mxu0 0.0
      %529 = vmatpush1.msra.mxu0 0.0
      %530 = vmatprep.subr.mxu0 0.0
      %531 = vmatpush1.msra.mxu0 0.0
      %532 = vmatprep.subr.mxu0 0.0
      %533 = vmatpush1.msra.mxu0 0.0
      %534 = vmatprep.subr.mxu0 0.0
      %535 = vmatpush1.msra.mxu0 0.0
      %536 = vmatprep.subr.mxu0 0.0
      %537 = vmatpush1.msra.mxu0 0.0
      %538 = vmatprep.subr.mxu0 0.0
      %539 = vmatpush1.msra.mxu0 0.0
      %540 = vmatprep.subr.mxu0 0.0
      %541 = vmatpush1.msra.mxu0 0.0
      %542 = vmatprep.subr.mxu0 0.0
      %543 = vmatpush1.msra.mxu0 0.0
      %544 = vmatprep.subr.mxu0 0.0
      %545 = vmatpush1.msra.mxu0 0.0
      %546 = vmatprep.subr.mxu0 0.0
      %547 = vmatpush1.msra.mxu0 0.0
      %548 = vmatprep.subr.mxu0 0.0
      %549 = vmatpush1.msra.mxu0 0.0
      %550 = vmatprep.subr.mxu0 0.0
      %551 = vmatpush1.msra.mxu0 0.0
      %552 = vmatprep.subr.mxu0 0.0
      %553 = vmatpush1.msra.mxu0 0.0
      %554 = vmatprep.subr.mxu0 0.0
      %555 = vmatpush1.msra.mxu0 0.0
      %556 = vmatprep.subr.mxu0 0.0
      %557 = vmatpush1.msra.mxu0 0.0
      %558 = vmatprep.subr.mxu0 0.0
      %559 = vmatpush1.msra.mxu0 0.0
      %560 = vmatprep.subr.mxu0 0.0
      %561 = vmatpush1.msra.mxu0 0.0
      %562 = vmatprep.subr.mxu0 0.0
      %563 = vmatpush1.msra.mxu0 0.0
      %564 = vmatprep.subr.mxu0 0.0
      %565 = vmatpush1.msra.mxu0 0.0
      %566 = vmatprep.subr.mxu0 0.0
      %567 = vmatpush1.msra.mxu0 0.0
      %568 = vmatprep.subr.mxu0 0.0
      %569 = vmatpush1.msra.mxu0 0.0
      %570 = vmatprep.subr.mxu0 0.0
      %571 = vmatpush1.msra.mxu0 0.0
      %572 = vmatprep.subr.mxu0 0.0
      %573 = vmatpush1.msra.mxu0 0.0
      %574 = vmatprep.subr.mxu0 0.0
      %575 = vmatpush1.msra.mxu0 0.0
      %576 = vmatprep.subr.mxu0 0.0
      %577 = vmatpush1.msra.mxu0 0.0
      %578 = vmatprep.mubr.f32.mxu0 0.0
      %579 = vmatmul.mubr.f32.gmra.mrb[0].mxu0 %v512
      %v580 = vpop.f32.mrb[0].mxu0
      %v581 = vadd.f32 0.0, %v580
      %v582 = vpop.f32.mrb[0].mxu0
      %583 = vdwg.mxu0
      %v584 = vmul.f32 %v581, %v581
      %586 = vrot.lane.b32.xlu0 %v584, 32
      %v587 = vpop.permute.xlu0 %586
      %v589 = vsel %vm221, %v581, %v587
      %v590 = vsel %vm223, %v589, 0.0
      %v591 = vrot.slane %v590, 4
      %v592 = vadd.f32 %v590, %v591
      %v593 = vrot.slane %v592, 2
      %v594 = vadd.f32 %v592, %v593
      %v595 = vrot.slane %v594, 1
      %v596 = vadd.f32 %v594, %v595
      %v597 = vmul.f32 %v596, 0.125
      %v598 = vmul.f32 %v597, %v597
      %600 = vrot.lane.b32.xlu0 %v598, 32
      %v601 = vpop.permute.xlu0 %600
      %v603 = vsub.f32 %v597, %v601
      %v604 = vmax.f32 %v603, 0.0
      %v605 = vld [vmem:[%s1 + $0xd6] sm:$0x3]
      %v606 = vadd.f32 %v604, 1e-05
      %v607 = vrsqrt.pop %v606
      %609 = vrot.lane.b32.xlu0 %v607, 96
      %v610 = vpop.permute.xlu0 %609
      %v612 = vmul.f32 %v605, %v610
      %v613 = vmul.f32 %v597, %v612
      %v615 = vrot.slane %v613, 7
      %v617 = vsub.f32 %v605, %v615
      %v618 = vlaneseq
      %v619 = vshrl.u32 %v618, 7
      %v620 = vsub.s32 0, %v619
      %v621 = vrot.slane %v612, %v620
      %v622 = vmul.f32 %v581, %v621
      %v623 = vlaneseq
      %v624 = vshrl.u32 %v623, 7
      %v625 = vsub.s32 1, %v624
      %v626 = vrot.slane %v617, %v625
      %v627 = vadd.f32 %v622, %v626
      %v628 = vmax.f32 %v627, 0.0
      %v629 = vld [vmem:[%s1 + $0x70] sm:$0xff]
      %v630 = vld [vmem:[%s1 + $0x78] sm:$0xff]
      %v631 = vld [vmem:[%s1 + $0x80] sm:$0xff]
      %v632 = vld [vmem:[%s1 + $0x88] sm:$0xff]
      %v634 = vsel %vm221, %v628, 0
      %636 = vmatprep.subr.mxu0 0.0
      %637 = vmatpush1.msra.mxu0 %v629
      %638 = vmatprep.subr.mxu0 0.0
      %639 = vmatpush1.msra.mxu0 %v630
      %640 = vmatprep.subr.mxu0 0.0
      %641 = vmatpush1.msra.mxu0 %v631
      %642 = vmatprep.subr.mxu0 0.0
      %643 = vmatpush1.msra.mxu0 %v632
      %644 = vmatprep.subr.mxu0 0.0
      %645 = vmatpush1.msra.mxu0 0.0
      %646 = vmatprep.subr.mxu0 0.0
      %647 = vmatpush1.msra.mxu0 0.0
      %648 = vmatprep.subr.mxu0 0.0
      %649 = vmatpush1.msra.mxu0 0.0
      %650 = vmatprep.subr.mxu0 0.0
      %651 = vmatpush1.msra.mxu0 0.0
      %652 = vmatprep.subr.mxu0 0.0
      %653 = vmatpush1.msra.mxu0 0.0
      %654 = vmatprep.subr.mxu0 0.0
      %655 = vmatpush1.msra.mxu0 0.0
      %656 = vmatprep.subr.mxu0 0.0
      %657 = vmatpush1.msra.mxu0 0.0
      %658 = vmatprep.subr.mxu0 0.0
      %659 = vmatpush1.msra.mxu0 0.0
      %660 = vmatprep.subr.mxu0 0.0
      %661 = vmatpush1.msra.mxu0 0.0
      %662 = vmatprep.subr.mxu0 0.0
      %663 = vmatpush1.msra.mxu0 0.0
      %664 = vmatprep.subr.mxu0 0.0
      %665 = vmatpush1.msra.mxu0 0.0
      %666 = vmatprep.subr.mxu0 0.0
      %667 = vmatpush1.msra.mxu0 0.0
      %668 = vmatprep.subr.mxu0 0.0
      %669 = vmatpush1.msra.mxu0 0.0
      %670 = vmatprep.subr.mxu0 0.0
      %671 = vmatpush1.msra.mxu0 0.0
      %672 = vmatprep.subr.mxu0 0.0
      %673 = vmatpush1.msra.mxu0 0.0
      %674 = vmatprep.subr.mxu0 0.0
      %675 = vmatpush1.msra.mxu0 0.0
      %676 = vmatprep.subr.mxu0 0.0
      %677 = vmatpush1.msra.mxu0 0.0
      %678 = vmatprep.subr.mxu0 0.0
      %679 = vmatpush1.msra.mxu0 0.0
      %680 = vmatprep.subr.mxu0 0.0
      %681 = vmatpush1.msra.mxu0 0.0
      %682 = vmatprep.subr.mxu0 0.0
      %683 = vmatpush1.msra.mxu0 0.0
      %684 = vmatprep.subr.mxu0 0.0
      %685 = vmatpush1.msra.mxu0 0.0
      %686 = vmatprep.subr.mxu0 0.0
      %687 = vmatpush1.msra.mxu0 0.0
      %688 = vmatprep.subr.mxu0 0.0
      %689 = vmatpush1.msra.mxu0 0.0
      %690 = vmatprep.subr.mxu0 0.0
      %691 = vmatpush1.msra.mxu0 0.0
      %692 = vmatprep.subr.mxu0 0.0
      %693 = vmatpush1.msra.mxu0 0.0
      %694 = vmatprep.subr.mxu0 0.0
      %695 = vmatpush1.msra.mxu0 0.0
      %696 = vmatprep.subr.mxu0 0.0
      %697 = vmatpush1.msra.mxu0 0.0
      %698 = vmatprep.subr.mxu0 0.0
      %699 = vmatpush1.msra.mxu0 0.0
      %700 = vmatprep.mubr.f32.mxu0 0.0
      %701 = vmatmul.mubr.f32.gmra.mrb[0].mxu0 %v634
      %v702 = vpop.f32.mrb[0].mxu0
      %v703 = vadd.f32 0.0, %v702
      %v704 = vpop.f32.mrb[0].mxu0
      %705 = vdwg.mxu0
      %v706 = vmul.f32 %v703, %v703
      %708 = vrot.lane.b32.xlu0 %v706, 32
      %v709 = vpop.permute.xlu0 %708
      %v711 = vsel %vm221, %v703, %v709
      %v712 = vsel %vm223, %v711, 0.0
      %v713 = vrot.slane %v712, 4
      %v714 = vadd.f32 %v712, %v713
      %v715 = vrot.slane %v714, 2
      %v716 = vadd.f32 %v714, %v715
      %v717 = vrot.slane %v716, 1
      %v718 = vadd.f32 %v716, %v717
      %v719 = vmul.f32 %v718, 0.125
      %v720 = vmul.f32 %v719, %v719
      %722 = vrot.lane.b32.xlu0 %v720, 32
      %v723 = vpop.permute.xlu0 %722
      %v725 = vsub.f32 %v719, %v723
      %v726 = vmax.f32 %v725, 0.0
      %v727 = vld [vmem:[%s1 + $0xd8] sm:$0x3]
      %v728 = vadd.f32 %v726, 1e-05
      %v729 = vrsqrt.pop %v728
      %731 = vrot.lane.b32.xlu0 %v729, 96
      %v732 = vpop.permute.xlu0 %731
      %v734 = vmul.f32 %v727, %v732
      %v735 = vmul.f32 %v719, %v734
      %v737 = vrot.slane %v735, 7
      %v739 = vsub.f32 %v727, %v737
      %v740 = vlaneseq
      %v741 = vshrl.u32 %v740, 7
      %v742 = vsub.s32 0, %v741
      %v743 = vrot.slane %v734, %v742
      %v744 = vmul.f32 %v703, %v743
      %v745 = vlaneseq
      %v746 = vshrl.u32 %v745, 7
      %v747 = vsub.s32 1, %v746
      %v748 = vrot.slane %v739, %v747
      %v749 = vadd.f32 %v744, %v748
      %v750 = vmax.f32 %v749, 0.0
      %v751 = vld [vmem:[%s1 + $0x90] sm:$0xff]
      %v752 = vld [vmem:[%s1 + $0x98] sm:$0xff]
      %v753 = vld [vmem:[%s1 + $0xa0] sm:$0xff]
      %v754 = vld [vmem:[%s1 + $0xa8] sm:$0xff]
      %v756 = vsel %vm221, %v750, 0
      %758 = vmatprep.subr.mxu0 0.0
      %759 = vmatpush1.msra.mxu0 %v751
      %760 = vmatprep.subr.mxu0 0.0
      %761 = vmatpush1.msra.mxu0 %v752
      %762 = vmatprep.subr.mxu0 0.0
      %763 = vmatpush1.msra.mxu0 %v753
      %764 = vmatprep.subr.mxu0 0.0
      %765 = vmatpush1.msra.mxu0 %v754
      %766 = vmatprep.subr.mxu0 0.0
      %767 = vmatpush1.msra.mxu0 0.0
      %768 = vmatprep.subr.mxu0 0.0
      %769 = vmatpush1.msra.mxu0 0.0
      %770 = vmatprep.subr.mxu0 0.0
      %771 = vmatpush1.msra.mxu0 0.0
      %772 = vmatprep.subr.mxu0 0.0
      %773 = vmatpush1.msra.mxu0 0.0
      %774 = vmatprep.subr.mxu0 0.0
      %775 = vmatpush1.msra.mxu0 0.0
      %776 = vmatprep.subr.mxu0 0.0
      %777 = vmatpush1.msra.mxu0 0.0
      %778 = vmatprep.subr.mxu0 0.0
      %779 = vmatpush1.msra.mxu0 0.0
      %780 = vmatprep.subr.mxu0 0.0
      %781 = vmatpush1.msra.mxu0 0.0
      %782 = vmatprep.subr.mxu0 0.0
      %783 = vmatpush1.msra.mxu0 0.0
      %784 = vmatprep.subr.mxu0 0.0
      %785 = vmatpush1.msra.mxu0 0.0
      %786 = vmatprep.subr.mxu0 0.0
      %787 = vmatpush1.msra.mxu0 0.0
      %788 = vmatprep.subr.mxu0 0.0
      %789 = vmatpush1.msra.mxu0 0.0
      %790 = vmatprep.subr.mxu0 0.0
      %791 = vmatpush1.msra.mxu0 0.0
      %792 = vmatprep.subr.mxu0 0.0
      %793 = vmatpush1.msra.mxu0 0.0
      %794 = vmatprep.subr.mxu0 0.0
      %795 = vmatpush1.msra.mxu0 0.0
      %796 = vmatprep.subr.mxu0 0.0
      %797 = vmatpush1.msra.mxu0 0.0
      %798 = vmatprep.subr.mxu0 0.0
      %799 = vmatpush1.msra.mxu0 0.0
      %800 = vmatprep.subr.mxu0 0.0
      %801 = vmatpush1.msra.mxu0 0.0
      %802 = vmatprep.subr.mxu0 0.0
      %803 = vmatpush1.msra.mxu0 0.0
      %804 = vmatprep.subr.mxu0 0.0
      %805 = vmatpush1.msra.mxu0 0.0
      %806 = vmatprep.subr.mxu0 0.0
      %807 = vmatpush1.msra.mxu0 0.0
      %808 = vmatprep.subr.mxu0 0.0
      %809 = vmatpush1.msra.mxu0 0.0
      %810 = vmatprep.subr.mxu0 0.0
      %811 = vmatpush1.msra.mxu0 0.0
      %812 = vmatprep.subr.mxu0 0.0
      %813 = vmatpush1.msra.mxu0 0.0
      %814 = vmatprep.subr.mxu0 0.0
      %815 = vmatpush1.msra.mxu0 0.0
      %816 = vmatprep.subr.mxu0 0.0
      %817 = vmatpush1.msra.mxu0 0.0
      %818 = vmatprep.subr.mxu0 0.0
      %819 = vmatpush1.msra.mxu0 0.0
      %820 = vmatprep.subr.mxu0 0.0
      %821 = vmatpush1.msra.mxu0 0.0
      %822 = vmatprep.mubr.f32.mxu0 0.0
      %823 = vmatmul.mubr.f32.gmra.mrb[0].mxu0 %v756
      %v824 = vpop.f32.mrb[0].mxu0
      %v825 = vadd.f32 0.0, %v824
      %v826 = vpop.f32.mrb[0].mxu0
      %827 = vdwg.mxu0
      %v828 = vmul.f32 %v825, %v825
      %830 = vrot.lane.b32.xlu0 %v828, 32
      %v831 = vpop.permute.xlu0 %830
      %v833 = vsel %vm221, %v825, %v831
      %v834 = vsel %vm223, %v833, 0.0
      %v835 = vrot.slane %v834, 4
      %v836 = vadd.f32 %v834, %v835
      %v837 = vrot.slane %v836, 2
      %v838 = vadd.f32 %v836, %v837
      %v839 = vrot.slane %v838, 1
      %v840 = vadd.f32 %v838, %v839
      %v841 = vmul.f32 %v840, 0.125
      %v842 = vmul.f32 %v841, %v841
      %844 = vrot.lane.b32.xlu0 %v842, 32
      %v845 = vpop.permute.xlu0 %844
      %v847 = vsub.f32 %v841, %v845
      %v848 = vmax.f32 %v847, 0.0
      %v849 = vld [vmem:[%s1 + $0xda] sm:$0x3]
      %v850 = vadd.f32 %v848, 1e-05
      %v851 = vrsqrt.pop %v850
      %853 = vrot.lane.b32.xlu0 %v851, 96
      %v854 = vpop.permute.xlu0 %853
      %v856 = vmul.f32 %v849, %v854
      %v857 = vmul.f32 %v841, %v856
      %v859 = vrot.slane %v857, 7
      %v861 = vsub.f32 %v849, %v859
      %v862 = vlaneseq
      %v863 = vshrl.u32 %v862, 7
      %v864 = vsub.s32 0, %v863
      %v865 = vrot.slane %v856, %v864
      %v866 = vmul.f32 %v825, %v865
      %v867 = vlaneseq
      %v868 = vshrl.u32 %v867, 7
      %v869 = vsub.s32 1, %v868
      %v870 = vrot.slane %v861, %v869
      %v871 = vadd.f32 %v866, %v870
      %v872 = vmax.f32 %v871, 0.0
      %v873 = vld [vmem:[%s1 + $0xb0] sm:$0xff]
      %v874 = vld [vmem:[%s1 + $0xb8] sm:$0xff]
      %v875 = vld [vmem:[%s1 + $0xc0] sm:$0xff]
      %v876 = vld [vmem:[%s1 + $0xc8] sm:$0xff]
      %v878 = vsel %vm221, %v872, 0
      %880 = vmatprep.subr.mxu0 0.0
      %881 = vmatpush1.msra.mxu0 %v873
      %882 = vmatprep.subr.mxu0 0.0
      %883 = vmatpush1.msra.mxu0 %v874
      %884 = vmatprep.subr.mxu0 0.0
      %885 = vmatpush1.msra.mxu0 %v875
      %886 = vmatprep.subr.mxu0 0.0
      %887 = vmatpush1.msra.mxu0 %v876
      %888 = vmatprep.subr.mxu0 0.0
      %889 = vmatpush1.msra.mxu0 0.0
      %890 = vmatprep.subr.mxu0 0.0
      %891 = vmatpush1.msra.mxu0 0.0
      %892 = vmatprep.subr.mxu0 0.0
      %893 = vmatpush1.msra.mxu0 0.0
      %894 = vmatprep.subr.mxu0 0.0
      %895 = vmatpush1.msra.mxu0 0.0
      %896 = vmatprep.subr.mxu0 0.0
      %897 = vmatpush1.msra.mxu0 0.0
      %898 = vmatprep.subr.mxu0 0.0
      %899 = vmatpush1.msra.mxu0 0.0
      %900 = vmatprep.subr.mxu0 0.0
      %901 = vmatpush1.msra.mxu0 0.0
      %902 = vmatprep.subr.mxu0 0.0
      %903 = vmatpush1.msra.mxu0 0.0
      %904 = vmatprep.subr.mxu0 0.0
      %905 = vmatpush1.msra.mxu0 0.0
      %906 = vmatprep.subr.mxu0 0.0
      %907 = vmatpush1.msra.mxu0 0.0
      %908 = vmatprep.subr.mxu0 0.0
      %909 = vmatpush1.msra.mxu0 0.0
      %910 = vmatprep.subr.mxu0 0.0
      %911 = vmatpush1.msra.mxu0 0.0
      %912 = vmatprep.subr.mxu0 0.0
      %913 = vmatpush1.msra.mxu0 0.0
      %914 = vmatprep.subr.mxu0 0.0
      %915 = vmatpush1.msra.mxu0 0.0
      %916 = vmatprep.subr.mxu0 0.0
      %917 = vmatpush1.msra.mxu0 0.0
      %918 = vmatprep.subr.mxu0 0.0
      %919 = vmatpush1.msra.mxu0 0.0
      %920 = vmatprep.subr.mxu0 0.0
      %921 = vmatpush1.msra.mxu0 0.0
      %922 = vmatprep.subr.mxu0 0.0
      %923 = vmatpush1.msra.mxu0 0.0
      %924 = vmatprep.subr.mxu0 0.0
      %925 = vmatpush1.msra.mxu0 0.0
      %926 = vmatprep.subr.mxu0 0.0
      %927 = vmatpush1.msra.mxu0 0.0
      %928 = vmatprep.subr.mxu0 0.0
      %929 = vmatpush1.msra.mxu0 0.0
      %930 = vmatprep.subr.mxu0 0.0
      %931 = vmatpush1.msra.mxu0 0.0
      %932 = vmatprep.subr.mxu0 0.0
      %933 = vmatpush1.msra.mxu0 0.0
      %934 = vmatprep.subr.mxu0 0.0
      %935 = vmatpush1.msra.mxu0 0.0
      %936 = vmatprep.subr.mxu0 0.0
      %937 = vmatpush1.msra.mxu0 0.0
      %938 = vmatprep.subr.mxu0 0.0
      %939 = vmatpush1.msra.mxu0 0.0
      %940 = vmatprep.subr.mxu0 0.0
      %941 = vmatpush1.msra.mxu0 0.0
      %942 = vmatprep.subr.mxu0 0.0
      %943 = vmatpush1.msra.mxu0 0.0
      %944 = vmatprep.mubr.f32.mxu0 0.0
      %945 = vmatmul.mubr.f32.gmra.mrb[0].mxu0 %v878
      %v946 = vpop.f32.mrb[0].mxu0
      %v947 = vadd.f32 0.0, %v946
      %v948 = vpop.f32.mrb[0].mxu0
      %949 = vdwg.mxu0
      %v950 = vmul.f32 %v947, %v947
      %952 = vrot.lane.b32.xlu0 %v950, 32
      %v953 = vpop.permute.xlu0 %952
      %v955 = vsel %vm221, %v947, %v953
      %v956 = vsel %vm223, %v955, 0.0
      %v957 = vrot.slane %v956, 4
      %v958 = vadd.f32 %v956, %v957
      %v959 = vrot.slane %v958, 2
      %v960 = vadd.f32 %v958, %v959
      %v961 = vrot.slane %v960, 1
      %v962 = vadd.f32 %v960, %v961
      %v963 = vmul.f32 %v962, 0.125
      %v964 = vmul.f32 %v963, %v963
      %966 = vrot.lane.b32.xlu0 %v964, 32
      %v967 = vpop.permute.xlu0 %966
      %v969 = vsub.f32 %v963, %v967
      %v970 = vmax.f32 %v969, 0.0
      %v971 = vld [vmem:[%s1 + $0xdc] sm:$0x3]
      %v972 = vadd.f32 %v970, 1e-05
      %v973 = vrsqrt.pop %v972
      %975 = vrot.lane.b32.xlu0 %v973, 96
      %v976 = vpop.permute.xlu0 %975
      %v978 = vmul.f32 %v971, %v976
      %v979 = vmul.f32 %v963, %v978
      %v981 = vrot.slane %v979, 7
      %v983 = vsub.f32 %v971, %v981
      %v984 = vlaneseq
      %v985 = vshrl.u32 %v984, 7
      %v986 = vsub.s32 0, %v985
      %v987 = vrot.slane %v978, %v986
      %v988 = vmul.f32 %v947, %v987
      %v989 = vlaneseq
      %v990 = vshrl.u32 %v989, 7
      %v991 = vsub.s32 1, %v990
      %v992 = vrot.slane %v983, %v991
      %v993 = vadd.f32 %v988, %v992
      %v994 = vmax.f32 %v993, 0.0
      %v995 = vld [vmem:[%s1 + $0xe0] sm:$0x3]
      %v996 = vld [vmem:[%s1 + $0xe2] sm:$0x1]
      %v997 = vlaneseq
      %v998 = vshrl.u32 %v997, 7
      %v999 = vsub.s32 0, %v998
      %v1000 = vrot.slane %v996, %v999
      %v1002 = vsel %vm221, %v994, 0
      %v1005 = vsel %vm221, %v995, 0
      %1007 = vmatprep.subr.mxu0 0.0
      %1008 = vmatpush1.xpose.msra.mxu0 %v1005
      %1009 = vmatprep.subr.mxu0 0.0
      %1010 = vmatpush1.xpose.msra.mxu0 0.0
      %1011 = vmatprep.subr.mxu0 0.0
      %1012 = vmatpush1.xpose.msra.mxu0 0.0
      %1013 = vmatprep.subr.mxu0 0.0
      %1014 = vmatpush1.xpose.msra.mxu0 0.0
      %1015 = vmatprep.subr.mxu0 0.0
      %1016 = vmatpush1.xpose.msra.mxu0 0.0
      %1017 = vmatprep.subr.mxu0 0.0
      %1018 = vmatpush1.xpose.msra.mxu0 0.0
      %1019 = vmatprep.subr.mxu0 0.0
      %1020 = vmatpush1.xpose.msra.mxu0 0.0
      %1021 = vmatprep.subr.mxu0 0.0
      %1022 = vmatpush1.xpose.msra.mxu0 0.0
      %1023 = vmatprep.subr.mxu0 0.0
      %1024 = vmatpush1.xpose.msra.mxu0 0.0
      %1025 = vmatprep.subr.mxu0 0.0
      %1026 = vmatpush1.xpose.msra.mxu0 0.0
      %1027 = vmatprep.subr.mxu0 0.0
      %1028 = vmatpush1.xpose.msra.mxu0 0.0
      %1029 = vmatprep.subr.mxu0 0.0
      %1030 = vmatpush1.xpose.msra.mxu0 0.0
      %1031 = vmatprep.subr.mxu0 0.0
      %1032 = vmatpush1.xpose.msra.mxu0 0.0
      %1033 = vmatprep.subr.mxu0 0.0
      %1034 = vmatpush1.xpose.msra.mxu0 0.0
      %1035 = vmatprep.subr.mxu0 0.0
      %1036 = vmatpush1.xpose.msra.mxu0 0.0
      %1037 = vmatprep.subr.mxu0 0.0
      %1038 = vmatpush1.xpose.msra.mxu0 0.0
      %1039 = vmatprep.subr.mxu0 0.0
      %1040 = vmatpush1.xpose.msra.mxu0 0.0
      %1041 = vmatprep.subr.mxu0 0.0
      %1042 = vmatpush1.xpose.msra.mxu0 0.0
      %1043 = vmatprep.subr.mxu0 0.0
      %1044 = vmatpush1.xpose.msra.mxu0 0.0
      %1045 = vmatprep.subr.mxu0 0.0
      %1046 = vmatpush1.xpose.msra.mxu0 0.0
      %1047 = vmatprep.subr.mxu0 0.0
      %1048 = vmatpush1.xpose.msra.mxu0 0.0
      %1049 = vmatprep.subr.mxu0 0.0
      %1050 = vmatpush1.xpose.msra.mxu0 0.0
      %1051 = vmatprep.subr.mxu0 0.0
      %1052 = vmatpush1.xpose.msra.mxu0 0.0
      %1053 = vmatprep.subr.mxu0 0.0
      %1054 = vmatpush1.xpose.msra.mxu0 0.0
      %1055 = vmatprep.subr.mxu0 0.0
      %1056 = vmatpush1.xpose.msra.mxu0 0.0
      %1057 = vmatprep.subr.mxu0 0.0
      %1058 = vmatpush1.xpose.msra.mxu0 0.0
      %1059 = vmatprep.subr.mxu0 0.0
      %1060 = vmatpush1.xpose.msra.mxu0 0.0
      %1061 = vmatprep.subr.mxu0 0.0
      %1062 = vmatpush1.xpose.msra.mxu0 0.0
      %1063 = vmatprep.subr.mxu0 0.0
      %1064 = vmatpush1.xpose.msra.mxu0 0.0
      %1065 = vmatprep.subr.mxu0 0.0
      %1066 = vmatpush1.xpose.msra.mxu0 0.0
      %1067 = vmatprep.subr.mxu0 0.0
      %1068 = vmatpush1.xpose.msra.mxu0 0.0
      %1069 = vmatprep.subr.mxu0 0.0
      %1070 = vmatpush1.xpose.msra.mxu0 0.0
      %1071 = vmatprep.mubr.f32.mxu0 0.0
      %1072 = vmatmul.mubr.f32.gmra.mrb[0].mxu0 %v1002
      %v1073 = vpop.f32.mrb[0].mxu0
      %v1074 = vadd.f32 %v1000, %v1073
      %v1075 = vpop.f32.mrb[0].mxu0
      %1076 = vdwg.mxu0
      %vm1077 = vcmask 15360
      %v1078 = vsel %vm1077, %v1074, -inf
      %1079 = vmax.xlane.f32.xlu0 %v1078
      %v1080 = vpop.xlane.xlu0 %1079
      %v1081 = vsub.f32 %v1074, %v1080
      %v1082 = vmul.f32 %v1081, 1.442695
      %v1083 = vpow.pop %v1082
      %v1084 = vsel %vm1077, %v1083, 0.0
      %1085 = vadd.xlane.f32.xlu0 %v1084
      %v1086 = vpop.xlane.xlu0 %1085
      %v1087 = vrcp.pop %v1086
      %v1088 = vmul.f32 %v1083, %v1087
      %1089 = vst.msk [vmem:[%s138] sm:$0xff] %vm1077, %v1088
      %p1090 = scmp.lt.s32.totalorder %s13, 3
      %s1091 = scalar_select %p1090, %s13, 3
      %s1092 = smul.addr %s1091, 8
      %s1093 = scalar_lea.vmem %s2, %s1092
      // Predicated region
      $region29: #{mlp_mach5_forward_batched.1} parent=27 // pred_check
        %p1094 = pneg %p78
      $region30: #{mlp_mach5_forward_batched.1} parent=27 // pred_check_branch
        %1096 = sbr.rel (%p1094) target = $region32
      $region31: #{mlp_mach5_forward_batched.1} parent=27 // pred_region
        _
      $region32: #{mlp_mach5_forward_batched.1} parent=27 // pred_fallthru
        _
    $region28: #{mlp_mach5_forward_batched.1} parent=5 // pred_fallthru
      _
    %p1097 = scmp.le.s32.totalorder 2, %s8
    // Predicated region
    $region33: #{mlp_mach5_forward_batched.1} parent=5 // pred_check
      %p1098 = pneg %p1097
    $region34: #{mlp_mach5_forward_batched.1} parent=5 // pred_check_branch
      %1100 = sbr.rel (%p1098) target = $region36
    $region35: #{mlp_mach5_forward_batched.1} parent=5 // pred_region
      %s1101 = ssub.s32 %s8, 2
      // Predicated region
      $region37: #{mlp_mach5_forward_batched.1} parent=35 // pred_check
        %p1102 = pneg %p84
      $region38: #{mlp_mach5_forward_batched.1} parent=35 // pred_check_branch
        %1104 = sbr.rel (%p1102) target = $region40
      $region39: #{mlp_mach5_forward_batched.1} parent=35 // pred_region
        %p1105 = scmp.lt.s32.totalorder %s14, 3
        %s1106 = scalar_select %p1105, %s14, 3
        %s1107 = smul.addr %s1106, 8
        %s1108 = scalar_lea.vmem %s2, %s1107
      $region40: #{mlp_mach5_forward_batched.1} parent=35 // pred_fallthru
        _
    $region36: #{mlp_mach5_forward_batched.1} parent=5 // pred_fallthru
      _
  $region6: #{mlp_mach5_forward_batched.1} parent=0 // loop_footer
    %s12 = sadd.s32 1, %s8
  $region7: #{mlp_mach5_forward_batched.1} parent=0 // loop_footer_branch
    %7 = sbr.rel target = $region3
  $region8: #{mlp_mach5_forward_batched.1} parent=0 // loop_exit
    _

</llo_original>
